<compile_context>
chip_gen: v5e
topology: v5e:2x2
jax: 0.10.0
libtpu: 0.0.40
codegen_flags: <defaults>
</compile_context>

<pallas_src>
import jax
import jax.numpy as jnp
from jax import lax
from jax.experimental import pallas as pl
from jax.experimental.pallas import tpu as pltpu


def _rnn_attn_kernel(tok_ref,                       # SMEM (T*BPad,) int32, time-major
                     embw_ref,                      # (V, 1, 4H) f32 : emb @ W_ih per vocab row
                     bg_ref,                        # (1, 4H) f32    : gate bias
                     whh_ref,                       # (H, 4H) bf16
                     wah_ref, wac_ref,              # (H, A) bf16
                     ba_ref, v_ref,                 # (1, A) f32
                     wout_ref, bo_ref,              # (H, O) bf16, (1, O) f32
                     bias_ref,                      # (BPad, T) f32 additive mask (0 / -1e9)
                     out_ref, attnw_ref):           # (BPad, O) f32, (BPad, T) f32
    H = whh_ref.shape[0]
    BPad, T = bias_ref.shape
    f32, bf16 = jnp.float32, jnp.bfloat16

    # ---- embedding gather prologue (tokens in SMEM; no one-hot matmul) -------------
    # gx[t][b] = emb[x_{t,b}] @ W_ih, gathered row-by-row from the folded table.
    gx = []
    for t in range(T):
        rows = [embw_ref[tok_ref[t * BPad + b]] for b in range(BPad)]   # each (1, 4H) f32
        gx.append(jnp.concatenate(rows, axis=0))                        # (BPad, 4H) f32

    whh = whh_ref[...]                                                  # (H, 4H) bf16
    bg = bg_ref[...]                                                    # (1, 4H) f32

    # ---- LSTM recurrence (fully unrolled; only h @ W_hh on the serial path) --------
    # TODO(synk): W_hh could be kept MXU-resident via pltpu.matmul_push_rhs /
    # matmul_acc_lhs; skipped here in favor of plain jnp.dot for lowering robustness
    # at these sub-tile shapes.
    c = jnp.zeros((BPad, H), f32)
    h_bf = None
    h_hist = []
    for t in range(T):
        gates = gx[t] + bg                                              # (BPad, 4H) f32
        if t > 0:
            gates = gates + jnp.dot(h_bf, whh, preferred_element_type=f32)
        i_g = jax.nn.sigmoid(gates[:, 0 * H:1 * H])
        f_g = jax.nn.sigmoid(gates[:, 1 * H:2 * H])
        g_g = jnp.tanh(gates[:, 2 * H:3 * H])
        o_g = jax.nn.sigmoid(gates[:, 3 * H:4 * H])
        c = f_g * c + i_g * g_g
        h = o_g * jnp.tanh(c)                                           # (BPad, H) f32
        h_bf = h.astype(bf16)                                           # single cast per step
        h_hist.append(h)

    # ---- ConcatAttention: context = final CELL state (final_hidden_states[1][-1]) --
    h_flat = jnp.concatenate(h_hist, axis=0)                            # (T*BPad, H) f32
    u = jnp.dot(h_flat.astype(bf16), wah_ref[...],
                preferred_element_type=f32)                             # one fused matmul
    q = jnp.dot(c.astype(bf16), wac_ref[...],
                preferred_element_type=f32) + ba_ref[...]               # (BPad, A)
    v = v_ref[...]                                                      # (1, A) f32

    # score assembly via lane-mask selects (no lane-axis concat of 1-lane columns)
    lane_t = lax.broadcasted_iota(jnp.int32, (BPad, T), 1)
    scores = jnp.zeros((BPad, T), f32)
    for t in range(T):
        e_t = jnp.tanh(u[t * BPad:(t + 1) * BPad, :] + q)               # (BPad, A)
        col = jnp.sum(e_t * v, axis=-1, keepdims=True)                  # (BPad, 1)
        scores = jnp.where(lane_t == t, col, scores)

    scores = scores + bias_ref[...]                                     # pad positions -> -1e9
    m = jnp.max(scores, axis=-1, keepdims=True)
    ex = jnp.exp(scores - m)
    w = ex * pl.reciprocal(jnp.sum(ex, axis=-1, keepdims=True), approx=True)   # (BPad, T)

    ctx = jnp.zeros((BPad, H), f32)
    for t in range(T):
        ctx = ctx + w[:, t:t + 1] * h_hist[t]                           # (BPad, H)

    # TODO(synk): nn.Dropout is identity at inference time; omitted.
    out_ref[...] = (jnp.dot(ctx.astype(bf16), wout_ref[...],
                            preferred_element_type=f32) + bo_ref[...])
    attnw_ref[...] = w


def _spec(shape):
    nd = len(shape)
    # index_map receives (grid idx, scalar-prefetch ref)
    return pl.BlockSpec(shape, lambda i, tok_ref, _nd=nd: (0,) * _nd)


def rnn_model_forward(x_tokens, params):
    """Inference forward of RNNModel. Returns (logits (B, O), attn weights (B, T))."""
    emb = params["embedding"]          # (V, E)
    w_ih = params["w_ih"]              # (E, 4H)
    w_hh = params["w_hh"]              # (H, 4H)
    b_g = params["b_gates"]            # (1, 4H)
    wah = params["w_attn_h"]           # (H, A)
    wac = params["w_attn_c"]           # (H, A)
    b_a = params["b_attn"]             # (1, A)
    v_a = params["v_attn"]             # (1, A)
    w_o = params["w_out"]              # (H, O)
    b_o = params["b_out"]              # (1, O)

    B, T = x_tokens.shape
    V = emb.shape[0]
    H = w_hh.shape[0]
    O = w_o.shape[1]
    GW = 4 * H                          # contiguous gate columns (no widening)
    BPad = max(8, ((B + 7) // 8) * 8)   # fill sublanes / keep slices 8-aligned

    # token prep: time-major flat ids for SMEM, additive attention-mask bias in f32.
    x_pad = jnp.zeros((BPad, T), jnp.int32).at[:B].set(x_tokens.astype(jnp.int32))
    tok_flat = x_pad.T.reshape(T * BPad)                     # row t*BPad + b
    attn_bias = jnp.where(x_pad == 0, jnp.float32(-1e9), jnp.float32(0.0))

    # fold the embedding into the LSTM input projection (exact, in f32).
    # TODO(synk): at production vocab sizes keep this table in HBM (memory_space=pl.ANY)
    # and DMA-gather rows instead of holding the (V, 4H) table resident in VMEM.
    embw = jnp.dot(emb.astype(jnp.float32), w_ih).reshape(V, 1, GW)

    bf16 = jnp.bfloat16
    args = (embw, b_g, w_hh.astype(bf16), wah.astype(bf16), wac.astype(bf16),
            b_a, v_a, w_o.astype(bf16), b_o, attn_bias)

    out_pad, attnw_pad = pl.pallas_call(
        _rnn_attn_kernel,
        grid_spec=pltpu.PrefetchScalarGridSpec(
            num_scalar_prefetch=1,
            grid=(1,),
            in_specs=[_spec(a.shape) for a in args],
            out_specs=[_spec((BPad, O)), _spec((BPad, T))]),
        out_shape=[jax.ShapeDtypeStruct((BPad, O), jnp.float32),
                   jax.ShapeDtypeStruct((BPad, T), jnp.float32)],
        compiler_params=pltpu.CompilerParams(
            dimension_semantics=("arbitrary",)),
    )(tok_flat, *args)
    return out_pad[:B], attnw_pad[:B]                        # (B, O), (B, T)


def rnn_model_reference(x_tokens, params):
    """Pure-JAX reference of the same forward pass (f32 everywhere)."""
    emb = params["embedding"]
    x = x_tokens.astype(jnp.int32)
    B, T = x.shape
    H = params["w_hh"].shape[0]
    e = emb[x]                                               # (B, T, E)

    def step(carry, x_t):
        h, c = carry
        gates = x_t @ params["w_ih"] + h @ params["w_hh"] + params["b_gates"]
        i = jax.nn.sigmoid(gates[:, :H])
        f = jax.nn.sigmoid(gates[:, H:2 * H])
        g = jnp.tanh(gates[:, 2 * H:3 * H])
        o = jax.nn.sigmoid(gates[:, 3 * H:])
        c = f * c + i * g
        h = o * jnp.tanh(c)
        return (h, c), h

    (_, cT), hs = lax.scan(step,
                           (jnp.zeros((B, H), jnp.float32), jnp.zeros((B, H), jnp.float32)),
                           jnp.transpose(e, (1, 0, 2)))
    hs = jnp.transpose(hs, (1, 0, 2))                        # (B, T, H)
    qc = cT @ params["w_attn_c"] + params["b_attn"]          # (B, A)
    energy = jnp.tanh(hs @ params["w_attn_h"] + qc[:, None, :])
    scores = jnp.sum(energy * params["v_attn"][None, :, :], axis=-1)   # (B, T)
    scores = jnp.where(x == 0, jnp.float32(-1e9), scores)
    w = jax.nn.softmax(scores, axis=-1)
    ctx = jnp.einsum("bt,bth->bh", w, hs)
    out = ctx @ params["w_out"] + params["b_out"]
    return out, w


def init_params(key, *, vocab=20, embed_dim=32, rnn_hidden=32, attn_hidden=32,
                num_outputs=5):
    ks = jax.random.split(key, 10)
    s = 0.1
    emb = jax.random.normal(ks[0], (vocab, embed_dim), jnp.float32)
    emb = emb.at[0].set(0.0)                                 # pad-token row
    w_ih = jax.random.normal(ks[1], (embed_dim, 4 * rnn_hidden), jnp.float32) * s
    w_hh = jax.random.normal(ks[2], (rnn_hidden, 4 * rnn_hidden), jnp.float32) * s
    b_ih = jax.random.normal(ks[3], (4 * rnn_hidden,), jnp.float32) * s
    b_hh = jax.random.normal(ks[4], (4 * rnn_hidden,), jnp.float32) * s
    b_gates = (b_ih + b_hh).reshape(1, 4 * rnn_hidden)
    w_attn = jax.random.normal(ks[5], (2 * rnn_hidden, attn_hidden), jnp.float32) * s
    b_attn = (jax.random.normal(ks[6], (attn_hidden,), jnp.float32) * s
              ).reshape(1, attn_hidden)
    v_attn = jax.random.normal(ks[7], (1, attn_hidden), jnp.float32) * s
    w_out = jax.random.normal(ks[8], (rnn_hidden, num_outputs), jnp.float32) * s
    b_out = (jax.random.normal(ks[9], (num_outputs,), jnp.float32) * s
             ).reshape(1, num_outputs)
    return {
        "embedding": emb,
        "w_ih": w_ih, "w_hh": w_hh, "b_gates": b_gates,
        "w_attn_h": w_attn[:rnn_hidden],       # (H, A)  acts on h_t
        "w_attn_c": w_attn[rnn_hidden:],       # (H, A)  acts on the context (c_T)
        "b_attn": b_attn, "v_attn": v_attn,
        "w_out": w_out, "b_out": b_out,
    }


if __name__ == "__main__":
    key = jax.random.PRNGKey(0)
    pkey, xkey = jax.random.split(key)
    params = init_params(pkey)

    B, T = 2, 8
    x = jax.random.randint(xkey, (B, T), 1, 20, dtype=jnp.int32)
    x = x.at[0, -2:].set(0).at[1, -4:].set(0)    # padded positions -> attention mask

    out, attn_weights = jax.jit(rnn_model_forward)(x, params)
    jax.block_until_ready((out, attn_weights))

    ref_out, ref_w = jax.jit(rnn_model_reference)(x, params)
    jax.block_until_ready((ref_out, ref_w))

    assert out.shape == (B, 5) and attn_weights.shape == (B, T)
    assert bool(jnp.all(jnp.isfinite(out)))
    assert bool(jnp.all(jnp.isfinite(attn_weights)))
    assert bool(jnp.allclose(out, ref_out, atol=5e-2, rtol=5e-2)), \
        f"logits mismatch: max abs diff {float(jnp.max(jnp.abs(out - ref_out)))}"
    assert bool(jnp.allclose(attn_weights, ref_w, atol=5e-2, rtol=5e-2)), \
        f"attn mismatch: max abs diff {float(jnp.max(jnp.abs(attn_weights - ref_w)))}"
    print("KERNEL_OK")
</pallas_src>

<mosaic_0001>
module attributes {stable_mosaic.version = 11 : i64} {
  func.func @_rnn_attn_kernel(%arg0: i32, %arg1: memref<64xi32, #tpu.memory_space<smem>>, %arg2: memref<20x1x128xf32, #tpu.memory_space<vmem>>, %arg3: memref<1x128xf32, #tpu.memory_space<vmem>>, %arg4: memref<32x128xbf16, #tpu.memory_space<vmem>>, %arg5: memref<32x32xbf16, #tpu.memory_space<vmem>>, %arg6: memref<32x32xbf16, #tpu.memory_space<vmem>>, %arg7: memref<1x32xf32, #tpu.memory_space<vmem>>, %arg8: memref<1x32xf32, #tpu.memory_space<vmem>>, %arg9: memref<32x5xbf16, #tpu.memory_space<vmem>>, %arg10: memref<1x5xf32, #tpu.memory_space<vmem>>, %arg11: memref<8x8xf32, #tpu.memory_space<vmem>>, %arg12: memref<8x5xf32, #tpu.memory_space<vmem>>, %arg13: memref<8x8xf32, #tpu.memory_space<vmem>>) attributes {dimension_semantics = [#tpu.dimension_semantics<arbitrary>], iteration_bounds = array<i64: 1>, scalar_prefetch = 1 : i64, scratch_operands = 0 : i64, tpu.core_type = #tpu.core_type<tc>, window_params = [{pipeline_mode = #tpu.pipeline_mode<synchronous>, transform_indices = @transform_0, window_bounds = array<i64: 20, 1, 128>}, {pipeline_mode = #tpu.pipeline_mode<synchronous>, transform_indices = @transform_1, window_bounds = array<i64: 1, 128>}, {pipeline_mode = #tpu.pipeline_mode<synchronous>, transform_indices = @transform_2, window_bounds = array<i64: 32, 128>}, {pipeline_mode = #tpu.pipeline_mode<synchronous>, transform_indices = @transform_3, window_bounds = array<i64: 32, 32>}, {pipeline_mode = #tpu.pipeline_mode<synchronous>, transform_indices = @transform_4, window_bounds = array<i64: 32, 32>}, {pipeline_mode = #tpu.pipeline_mode<synchronous>, transform_indices = @transform_5, window_bounds = array<i64: 1, 32>}, {pipeline_mode = #tpu.pipeline_mode<synchronous>, transform_indices = @transform_6, window_bounds = array<i64: 1, 32>}, {pipeline_mode = #tpu.pipeline_mode<synchronous>, transform_indices = @transform_7, window_bounds = array<i64: 32, 5>}, {pipeline_mode = #tpu.pipeline_mode<synchronous>, transform_indices = @transform_8, window_bounds = array<i64: 1, 5>}, {pipeline_mode = #tpu.pipeline_mode<synchronous>, transform_indices = @transform_9, window_bounds = array<i64: 8, 8>}, {pipeline_mode = #tpu.pipeline_mode<synchronous>, transform_indices = @transform_10, window_bounds = array<i64: 8, 5>}, {pipeline_mode = #tpu.pipeline_mode<synchronous>, transform_indices = @transform_11, window_bounds = array<i64: 8, 8>}]} {
    %c0 = arith.constant 0 : index
    %0 = memref.load %arg1[%c0] : memref<64xi32, #tpu.memory_space<smem>>
    %1 = arith.index_cast %0 : i32 to index
    %c0_0 = arith.constant 0 : index
    %c0_1 = arith.constant 0 : index
    %2 = vector.load %arg2[%1, %c0_0, %c0_1] : memref<20x1x128xf32, #tpu.memory_space<vmem>>, vector<1x1x128xf32>
    %3 = vector.shape_cast %2 : vector<1x1x128xf32> to vector<1x128xf32>
    %c1 = arith.constant 1 : index
    %4 = memref.load %arg1[%c1] : memref<64xi32, #tpu.memory_space<smem>>
    %5 = arith.index_cast %4 : i32 to index
    %c0_2 = arith.constant 0 : index
    %c0_3 = arith.constant 0 : index
    %6 = vector.load %arg2[%5, %c0_2, %c0_3] : memref<20x1x128xf32, #tpu.memory_space<vmem>>, vector<1x1x128xf32>
    %7 = vector.shape_cast %6 : vector<1x1x128xf32> to vector<1x128xf32>
    %c2 = arith.constant 2 : index
    %8 = memref.load %arg1[%c2] : memref<64xi32, #tpu.memory_space<smem>>
    %9 = arith.index_cast %8 : i32 to index
    %c0_4 = arith.constant 0 : index
    %c0_5 = arith.constant 0 : index
    %10 = vector.load %arg2[%9, %c0_4, %c0_5] : memref<20x1x128xf32, #tpu.memory_space<vmem>>, vector<1x1x128xf32>
    %11 = vector.shape_cast %10 : vector<1x1x128xf32> to vector<1x128xf32>
    %c3 = arith.constant 3 : index
    %12 = memref.load %arg1[%c3] : memref<64xi32, #tpu.memory_space<smem>>
    %13 = arith.index_cast %12 : i32 to index
    %c0_6 = arith.constant 0 : index
    %c0_7 = arith.constant 0 : index
    %14 = vector.load %arg2[%13, %c0_6, %c0_7] : memref<20x1x128xf32, #tpu.memory_space<vmem>>, vector<1x1x128xf32>
    %15 = vector.shape_cast %14 : vector<1x1x128xf32> to vector<1x128xf32>
    %c4 = arith.constant 4 : index
    %16 = memref.load %arg1[%c4] : memref<64xi32, #tpu.memory_space<smem>>
    %17 = arith.index_cast %16 : i32 to index
    %c0_8 = arith.constant 0 : index
    %c0_9 = arith.constant 0 : index
    %18 = vector.load %arg2[%17, %c0_8, %c0_9] : memref<20x1x128xf32, #tpu.memory_space<vmem>>, vector<1x1x128xf32>
    %19 = vector.shape_cast %18 : vector<1x1x128xf32> to vector<1x128xf32>
    %c5 = arith.constant 5 : index
    %20 = memref.load %arg1[%c5] : memref<64xi32, #tpu.memory_space<smem>>
    %21 = arith.index_cast %20 : i32 to index
    %c0_10 = arith.constant 0 : index
    %c0_11 = arith.constant 0 : index
    %22 = vector.load %arg2[%21, %c0_10, %c0_11] : memref<20x1x128xf32, #tpu.memory_space<vmem>>, vector<1x1x128xf32>
    %23 = vector.shape_cast %22 : vector<1x1x128xf32> to vector<1x128xf32>
    %c6 = arith.constant 6 : index
    %24 = memref.load %arg1[%c6] : memref<64xi32, #tpu.memory_space<smem>>
    %25 = arith.index_cast %24 : i32 to index
    %c0_12 = arith.constant 0 : index
    %c0_13 = arith.constant 0 : index
    %26 = vector.load %arg2[%25, %c0_12, %c0_13] : memref<20x1x128xf32, #tpu.memory_space<vmem>>, vector<1x1x128xf32>
    %27 = vector.shape_cast %26 : vector<1x1x128xf32> to vector<1x128xf32>
    %c7 = arith.constant 7 : index
    %28 = memref.load %arg1[%c7] : memref<64xi32, #tpu.memory_space<smem>>
    %29 = arith.index_cast %28 : i32 to index
    %c0_14 = arith.constant 0 : index
    %c0_15 = arith.constant 0 : index
    %30 = vector.load %arg2[%29, %c0_14, %c0_15] : memref<20x1x128xf32, #tpu.memory_space<vmem>>, vector<1x1x128xf32>
    %31 = vector.shape_cast %30 : vector<1x1x128xf32> to vector<1x128xf32>
    %32 = tpu.concatenate %3, %7, %11, %15, %19, %23, %27, %31 in 0 : vector<1x128xf32>, vector<1x128xf32>, vector<1x128xf32>, vector<1x128xf32>, vector<1x128xf32>, vector<1x128xf32>, vector<1x128xf32>, vector<1x128xf32> -> vector<8x128xf32>
    %c8 = arith.constant 8 : index
    %33 = memref.load %arg1[%c8] : memref<64xi32, #tpu.memory_space<smem>>
    %34 = arith.index_cast %33 : i32 to index
    %c0_16 = arith.constant 0 : index
    %c0_17 = arith.constant 0 : index
    %35 = vector.load %arg2[%34, %c0_16, %c0_17] : memref<20x1x128xf32, #tpu.memory_space<vmem>>, vector<1x1x128xf32>
    %36 = vector.shape_cast %35 : vector<1x1x128xf32> to vector<1x128xf32>
    %c9 = arith.constant 9 : index
    %37 = memref.load %arg1[%c9] : memref<64xi32, #tpu.memory_space<smem>>
    %38 = arith.index_cast %37 : i32 to index
    %c0_18 = arith.constant 0 : index
    %c0_19 = arith.constant 0 : index
    %39 = vector.load %arg2[%38, %c0_18, %c0_19] : memref<20x1x128xf32, #tpu.memory_space<vmem>>, vector<1x1x128xf32>
    %40 = vector.shape_cast %39 : vector<1x1x128xf32> to vector<1x128xf32>
    %c10 = arith.constant 10 : index
    %41 = memref.load %arg1[%c10] : memref<64xi32, #tpu.memory_space<smem>>
    %42 = arith.index_cast %41 : i32 to index
    %c0_20 = arith.constant 0 : index
    %c0_21 = arith.constant 0 : index
    %43 = vector.load %arg2[%42, %c0_20, %c0_21] : memref<20x1x128xf32, #tpu.memory_space<vmem>>, vector<1x1x128xf32>
    %44 = vector.shape_cast %43 : vector<1x1x128xf32> to vector<1x128xf32>
    %c11 = arith.constant 11 : index
    %45 = memref.load %arg1[%c11] : memref<64xi32, #tpu.memory_space<smem>>
    %46 = arith.index_cast %45 : i32 to index
    %c0_22 = arith.constant 0 : index
    %c0_23 = arith.constant 0 : index
    %47 = vector.load %arg2[%46, %c0_22, %c0_23] : memref<20x1x128xf32, #tpu.memory_space<vmem>>, vector<1x1x128xf32>
    %48 = vector.shape_cast %47 : vector<1x1x128xf32> to vector<1x128xf32>
    %c12 = arith.constant 12 : index
    %49 = memref.load %arg1[%c12] : memref<64xi32, #tpu.memory_space<smem>>
    %50 = arith.index_cast %49 : i32 to index
    %c0_24 = arith.constant 0 : index
    %c0_25 = arith.constant 0 : index
    %51 = vector.load %arg2[%50, %c0_24, %c0_25] : memref<20x1x128xf32, #tpu.memory_space<vmem>>, vector<1x1x128xf32>
    %52 = vector.shape_cast %51 : vector<1x1x128xf32> to vector<1x128xf32>
    %c13 = arith.constant 13 : index
    %53 = memref.load %arg1[%c13] : memref<64xi32, #tpu.memory_space<smem>>
    %54 = arith.index_cast %53 : i32 to index
    %c0_26 = arith.constant 0 : index
    %c0_27 = arith.constant 0 : index
    %55 = vector.load %arg2[%54, %c0_26, %c0_27] : memref<20x1x128xf32, #tpu.memory_space<vmem>>, vector<1x1x128xf32>
    %56 = vector.shape_cast %55 : vector<1x1x128xf32> to vector<1x128xf32>
    %c14 = arith.constant 14 : index
    %57 = memref.load %arg1[%c14] : memref<64xi32, #tpu.memory_space<smem>>
    %58 = arith.index_cast %57 : i32 to index
    %c0_28 = arith.constant 0 : index
    %c0_29 = arith.constant 0 : index
    %59 = vector.load %arg2[%58, %c0_28, %c0_29] : memref<20x1x128xf32, #tpu.memory_space<vmem>>, vector<1x1x128xf32>
    %60 = vector.shape_cast %59 : vector<1x1x128xf32> to vector<1x128xf32>
    %c15 = arith.constant 15 : index
    %61 = memref.load %arg1[%c15] : memref<64xi32, #tpu.memory_space<smem>>
    %62 = arith.index_cast %61 : i32 to index
    %c0_30 = arith.constant 0 : index
    %c0_31 = arith.constant 0 : index
    %63 = vector.load %arg2[%62, %c0_30, %c0_31] : memref<20x1x128xf32, #tpu.memory_space<vmem>>, vector<1x1x128xf32>
    %64 = vector.shape_cast %63 : vector<1x1x128xf32> to vector<1x128xf32>
    %65 = tpu.concatenate %36, %40, %44, %48, %52, %56, %60, %64 in 0 : vector<1x128xf32>, vector<1x128xf32>, vector<1x128xf32>, vector<1x128xf32>, vector<1x128xf32>, vector<1x128xf32>, vector<1x128xf32>, vector<1x128xf32> -> vector<8x128xf32>
    %c16 = arith.constant 16 : index
    %66 = memref.load %arg1[%c16] : memref<64xi32, #tpu.memory_space<smem>>
    %67 = arith.index_cast %66 : i32 to index
    %c0_32 = arith.constant 0 : index
    %c0_33 = arith.constant 0 : index
    %68 = vector.load %arg2[%67, %c0_32, %c0_33] : memref<20x1x128xf32, #tpu.memory_space<vmem>>, vector<1x1x128xf32>
    %69 = vector.shape_cast %68 : vector<1x1x128xf32> to vector<1x128xf32>
    %c17 = arith.constant 17 : index
    %70 = memref.load %arg1[%c17] : memref<64xi32, #tpu.memory_space<smem>>
    %71 = arith.index_cast %70 : i32 to index
    %c0_34 = arith.constant 0 : index
    %c0_35 = arith.constant 0 : index
    %72 = vector.load %arg2[%71, %c0_34, %c0_35] : memref<20x1x128xf32, #tpu.memory_space<vmem>>, vector<1x1x128xf32>
    %73 = vector.shape_cast %72 : vector<1x1x128xf32> to vector<1x128xf32>
    %c18 = arith.constant 18 : index
    %74 = memref.load %arg1[%c18] : memref<64xi32, #tpu.memory_space<smem>>
    %75 = arith.index_cast %74 : i32 to index
    %c0_36 = arith.constant 0 : index
    %c0_37 = arith.constant 0 : index
    %76 = vector.load %arg2[%75, %c0_36, %c0_37] : memref<20x1x128xf32, #tpu.memory_space<vmem>>, vector<1x1x128xf32>
    %77 = vector.shape_cast %76 : vector<1x1x128xf32> to vector<1x128xf32>
    %c19 = arith.constant 19 : index
    %78 = memref.load %arg1[%c19] : memref<64xi32, #tpu.memory_space<smem>>
    %79 = arith.index_cast %78 : i32 to index
    %c0_38 = arith.constant 0 : index
    %c0_39 = arith.constant 0 : index
    %80 = vector.load %arg2[%79, %c0_38, %c0_39] : memref<20x1x128xf32, #tpu.memory_space<vmem>>, vector<1x1x128xf32>
    %81 = vector.shape_cast %80 : vector<1x1x128xf32> to vector<1x128xf32>
    %c20 = arith.constant 20 : index
    %82 = memref.load %arg1[%c20] : memref<64xi32, #tpu.memory_space<smem>>
    %83 = arith.index_cast %82 : i32 to index
    %c0_40 = arith.constant 0 : index
    %c0_41 = arith.constant 0 : index
    %84 = vector.load %arg2[%83, %c0_40, %c0_41] : memref<20x1x128xf32, #tpu.memory_space<vmem>>, vector<1x1x128xf32>
    %85 = vector.shape_cast %84 : vector<1x1x128xf32> to vector<1x128xf32>
    %c21 = arith.constant 21 : index
    %86 = memref.load %arg1[%c21] : memref<64xi32, #tpu.memory_space<smem>>
    %87 = arith.index_cast %86 : i32 to index
    %c0_42 = arith.constant 0 : index
    %c0_43 = arith.constant 0 : index
    %88 = vector.load %arg2[%87, %c0_42, %c0_43] : memref<20x1x128xf32, #tpu.memory_space<vmem>>, vector<1x1x128xf32>
    %89 = vector.shape_cast %88 : vector<1x1x128xf32> to vector<1x128xf32>
    %c22 = arith.constant 22 : index
    %90 = memref.load %arg1[%c22] : memref<64xi32, #tpu.memory_space<smem>>
    %91 = arith.index_cast %90 : i32 to index
    %c0_44 = arith.constant 0 : index
    %c0_45 = arith.constant 0 : index
    %92 = vector.load %arg2[%91, %c0_44, %c0_45] : memref<20x1x128xf32, #tpu.memory_space<vmem>>, vector<1x1x128xf32>
    %93 = vector.shape_cast %92 : vector<1x1x128xf32> to vector<1x128xf32>
    %c23 = arith.constant 23 : index
    %94 = memref.load %arg1[%c23] : memref<64xi32, #tpu.memory_space<smem>>
    %95 = arith.index_cast %94 : i32 to index
    %c0_46 = arith.constant 0 : index
    %c0_47 = arith.constant 0 : index
    %96 = vector.load %arg2[%95, %c0_46, %c0_47] : memref<20x1x128xf32, #tpu.memory_space<vmem>>, vector<1x1x128xf32>
    %97 = vector.shape_cast %96 : vector<1x1x128xf32> to vector<1x128xf32>
    %98 = tpu.concatenate %69, %73, %77, %81, %85, %89, %93, %97 in 0 : vector<1x128xf32>, vector<1x128xf32>, vector<1x128xf32>, vector<1x128xf32>, vector<1x128xf32>, vector<1x128xf32>, vector<1x128xf32>, vector<1x128xf32> -> vector<8x128xf32>
    %c24 = arith.constant 24 : index
    %99 = memref.load %arg1[%c24] : memref<64xi32, #tpu.memory_space<smem>>
    %100 = arith.index_cast %99 : i32 to index
    %c0_48 = arith.constant 0 : index
    %c0_49 = arith.constant 0 : index
    %101 = vector.load %arg2[%100, %c0_48, %c0_49] : memref<20x1x128xf32, #tpu.memory_space<vmem>>, vector<1x1x128xf32>
    %102 = vector.shape_cast %101 : vector<1x1x128xf32> to vector<1x128xf32>
    %c25 = arith.constant 25 : index
    %103 = memref.load %arg1[%c25] : memref<64xi32, #tpu.memory_space<smem>>
    %104 = arith.index_cast %103 : i32 to index
    %c0_50 = arith.constant 0 : index
    %c0_51 = arith.constant 0 : index
    %105 = vector.load %arg2[%104, %c0_50, %c0_51] : memref<20x1x128xf32, #tpu.memory_space<vmem>>, vector<1x1x128xf32>
    %106 = vector.shape_cast %105 : vector<1x1x128xf32> to vector<1x128xf32>
    %c26 = arith.constant 26 : index
    %107 = memref.load %arg1[%c26] : memref<64xi32, #tpu.memory_space<smem>>
    %108 = arith.index_cast %107 : i32 to index
    %c0_52 = arith.constant 0 : index
    %c0_53 = arith.constant 0 : index
    %109 = vector.load %arg2[%108, %c0_52, %c0_53] : memref<20x1x128xf32, #tpu.memory_space<vmem>>, vector<1x1x128xf32>
    %110 = vector.shape_cast %109 : vector<1x1x128xf32> to vector<1x128xf32>
    %c27 = arith.constant 27 : index
    %111 = memref.load %arg1[%c27] : memref<64xi32, #tpu.memory_space<smem>>
    %112 = arith.index_cast %111 : i32 to index
    %c0_54 = arith.constant 0 : index
    %c0_55 = arith.constant 0 : index
    %113 = vector.load %arg2[%112, %c0_54, %c0_55] : memref<20x1x128xf32, #tpu.memory_space<vmem>>, vector<1x1x128xf32>
    %114 = vector.shape_cast %113 : vector<1x1x128xf32> to vector<1x128xf32>
    %c28 = arith.constant 28 : index
    %115 = memref.load %arg1[%c28] : memref<64xi32, #tpu.memory_space<smem>>
    %116 = arith.index_cast %115 : i32 to index
    %c0_56 = arith.constant 0 : index
    %c0_57 = arith.constant 0 : index
    %117 = vector.load %arg2[%116, %c0_56, %c0_57] : memref<20x1x128xf32, #tpu.memory_space<vmem>>, vector<1x1x128xf32>
    %118 = vector.shape_cast %117 : vector<1x1x128xf32> to vector<1x128xf32>
    %c29 = arith.constant 29 : index
    %119 = memref.load %arg1[%c29] : memref<64xi32, #tpu.memory_space<smem>>
    %120 = arith.index_cast %119 : i32 to index
    %c0_58 = arith.constant 0 : index
    %c0_59 = arith.constant 0 : index
    %121 = vector.load %arg2[%120, %c0_58, %c0_59] : memref<20x1x128xf32, #tpu.memory_space<vmem>>, vector<1x1x128xf32>
    %122 = vector.shape_cast %121 : vector<1x1x128xf32> to vector<1x128xf32>
    %c30 = arith.constant 30 : index
    %123 = memref.load %arg1[%c30] : memref<64xi32, #tpu.memory_space<smem>>
    %124 = arith.index_cast %123 : i32 to index
    %c0_60 = arith.constant 0 : index
    %c0_61 = arith.constant 0 : index
    %125 = vector.load %arg2[%124, %c0_60, %c0_61] : memref<20x1x128xf32, #tpu.memory_space<vmem>>, vector<1x1x128xf32>
    %126 = vector.shape_cast %125 : vector<1x1x128xf32> to vector<1x128xf32>
    %c31 = arith.constant 31 : index
    %127 = memref.load %arg1[%c31] : memref<64xi32, #tpu.memory_space<smem>>
    %128 = arith.index_cast %127 : i32 to index
    %c0_62 = arith.constant 0 : index
    %c0_63 = arith.constant 0 : index
    %129 = vector.load %arg2[%128, %c0_62, %c0_63] : memref<20x1x128xf32, #tpu.memory_space<vmem>>, vector<1x1x128xf32>
    %130 = vector.shape_cast %129 : vector<1x1x128xf32> to vector<1x128xf32>
    %131 = tpu.concatenate %102, %106, %110, %114, %118, %122, %126, %130 in 0 : vector<1x128xf32>, vector<1x128xf32>, vector<1x128xf32>, vector<1x128xf32>, vector<1x128xf32>, vector<1x128xf32>, vector<1x128xf32>, vector<1x128xf32> -> vector<8x128xf32>
    %c32 = arith.constant 32 : index
    %132 = memref.load %arg1[%c32] : memref<64xi32, #tpu.memory_space<smem>>
    %133 = arith.index_cast %132 : i32 to index
    %c0_64 = arith.constant 0 : index
    %c0_65 = arith.constant 0 : index
    %134 = vector.load %arg2[%133, %c0_64, %c0_65] : memref<20x1x128xf32, #tpu.memory_space<vmem>>, vector<1x1x128xf32>
    %135 = vector.shape_cast %134 : vector<1x1x128xf32> to vector<1x128xf32>
    %c33 = arith.constant 33 : index
    %136 = memref.load %arg1[%c33] : memref<64xi32, #tpu.memory_space<smem>>
    %137 = arith.index_cast %136 : i32 to index
    %c0_66 = arith.constant 0 : index
    %c0_67 = arith.constant 0 : index
    %138 = vector.load %arg2[%137, %c0_66, %c0_67] : memref<20x1x128xf32, #tpu.memory_space<vmem>>, vector<1x1x128xf32>
    %139 = vector.shape_cast %138 : vector<1x1x128xf32> to vector<1x128xf32>
    %c34 = arith.constant 34 : index
    %140 = memref.load %arg1[%c34] : memref<64xi32, #tpu.memory_space<smem>>
    %141 = arith.index_cast %140 : i32 to index
    %c0_68 = arith.constant 0 : index
    %c0_69 = arith.constant 0 : index
    %142 = vector.load %arg2[%141, %c0_68, %c0_69] : memref<20x1x128xf32, #tpu.memory_space<vmem>>, vector<1x1x128xf32>
    %143 = vector.shape_cast %142 : vector<1x1x128xf32> to vector<1x128xf32>
    %c35 = arith.constant 35 : index
    %144 = memref.load %arg1[%c35] : memref<64xi32, #tpu.memory_space<smem>>
    %145 = arith.index_cast %144 : i32 to index
    %c0_70 = arith.constant 0 : index
    %c0_71 = arith.constant 0 : index
    %146 = vector.load %arg2[%145, %c0_70, %c0_71] : memref<20x1x128xf32, #tpu.memory_space<vmem>>, vector<1x1x128xf32>
    %147 = vector.shape_cast %146 : vector<1x1x128xf32> to vector<1x128xf32>
    %c36 = arith.constant 36 : index
    %148 = memref.load %arg1[%c36] : memref<64xi32, #tpu.memory_space<smem>>
    %149 = arith.index_cast %148 : i32 to index
    %c0_72 = arith.constant 0 : index
    %c0_73 = arith.constant 0 : index
    %150 = vector.load %arg2[%149, %c0_72, %c0_73] : memref<20x1x128xf32, #tpu.memory_space<vmem>>, vector<1x1x128xf32>
    %151 = vector.shape_cast %150 : vector<1x1x128xf32> to vector<1x128xf32>
    %c37 = arith.constant 37 : index
    %152 = memref.load %arg1[%c37] : memref<64xi32, #tpu.memory_space<smem>>
    %153 = arith.index_cast %152 : i32 to index
    %c0_74 = arith.constant 0 : index
    %c0_75 = arith.constant 0 : index
    %154 = vector.load %arg2[%153, %c0_74, %c0_75] : memref<20x1x128xf32, #tpu.memory_space<vmem>>, vector<1x1x128xf32>
    %155 = vector.shape_cast %154 : vector<1x1x128xf32> to vector<1x128xf32>
    %c38 = arith.constant 38 : index
    %156 = memref.load %arg1[%c38] : memref<64xi32, #tpu.memory_space<smem>>
    %157 = arith.index_cast %156 : i32 to index
    %c0_76 = arith.constant 0 : index
    %c0_77 = arith.constant 0 : index
    %158 = vector.load %arg2[%157, %c0_76, %c0_77] : memref<20x1x128xf32, #tpu.memory_space<vmem>>, vector<1x1x128xf32>
    %159 = vector.shape_cast %158 : vector<1x1x128xf32> to vector<1x128xf32>
    %c39 = arith.constant 39 : index
    %160 = memref.load %arg1[%c39] : memref<64xi32, #tpu.memory_space<smem>>
    %161 = arith.index_cast %160 : i32 to index
    %c0_78 = arith.constant 0 : index
    %c0_79 = arith.constant 0 : index
    %162 = vector.load %arg2[%161, %c0_78, %c0_79] : memref<20x1x128xf32, #tpu.memory_space<vmem>>, vector<1x1x128xf32>
    %163 = vector.shape_cast %162 : vector<1x1x128xf32> to vector<1x128xf32>
    %164 = tpu.concatenate %135, %139, %143, %147, %151, %155, %159, %163 in 0 : vector<1x128xf32>, vector<1x128xf32>, vector<1x128xf32>, vector<1x128xf32>, vector<1x128xf32>, vector<1x128xf32>, vector<1x128xf32>, vector<1x128xf32> -> vector<8x128xf32>
    %c40 = arith.constant 40 : index
    %165 = memref.load %arg1[%c40] : memref<64xi32, #tpu.memory_space<smem>>
    %166 = arith.index_cast %165 : i32 to index
    %c0_80 = arith.constant 0 : index
    %c0_81 = arith.constant 0 : index
    %167 = vector.load %arg2[%166, %c0_80, %c0_81] : memref<20x1x128xf32, #tpu.memory_space<vmem>>, vector<1x1x128xf32>
    %168 = vector.shape_cast %167 : vector<1x1x128xf32> to vector<1x128xf32>
    %c41 = arith.constant 41 : index
    %169 = memref.load %arg1[%c41] : memref<64xi32, #tpu.memory_space<smem>>
    %170 = arith.index_cast %169 : i32 to index
    %c0_82 = arith.constant 0 : index
    %c0_83 = arith.constant 0 : index
    %171 = vector.load %arg2[%170, %c0_82, %c0_83] : memref<20x1x128xf32, #tpu.memory_space<vmem>>, vector<1x1x128xf32>
    %172 = vector.shape_cast %171 : vector<1x1x128xf32> to vector<1x128xf32>
    %c42 = arith.constant 42 : index
    %173 = memref.load %arg1[%c42] : memref<64xi32, #tpu.memory_space<smem>>
    %174 = arith.index_cast %173 : i32 to index
    %c0_84 = arith.constant 0 : index
    %c0_85 = arith.constant 0 : index
    %175 = vector.load %arg2[%174, %c0_84, %c0_85] : memref<20x1x128xf32, #tpu.memory_space<vmem>>, vector<1x1x128xf32>
    %176 = vector.shape_cast %175 : vector<1x1x128xf32> to vector<1x128xf32>
    %c43 = arith.constant 43 : index
    %177 = memref.load %arg1[%c43] : memref<64xi32, #tpu.memory_space<smem>>
    %178 = arith.index_cast %177 : i32 to index
    %c0_86 = arith.constant 0 : index
    %c0_87 = arith.constant 0 : index
    %179 = vector.load %arg2[%178, %c0_86, %c0_87] : memref<20x1x128xf32, #tpu.memory_space<vmem>>, vector<1x1x128xf32>
    %180 = vector.shape_cast %179 : vector<1x1x128xf32> to vector<1x128xf32>
    %c44 = arith.constant 44 : index
    %181 = memref.load %arg1[%c44] : memref<64xi32, #tpu.memory_space<smem>>
    %182 = arith.index_cast %181 : i32 to index
    %c0_88 = arith.constant 0 : index
    %c0_89 = arith.constant 0 : index
    %183 = vector.load %arg2[%182, %c0_88, %c0_89] : memref<20x1x128xf32, #tpu.memory_space<vmem>>, vector<1x1x128xf32>
    %184 = vector.shape_cast %183 : vector<1x1x128xf32> to vector<1x128xf32>
    %c45 = arith.constant 45 : index
    %185 = memref.load %arg1[%c45] : memref<64xi32, #tpu.memory_space<smem>>
    %186 = arith.index_cast %185 : i32 to index
    %c0_90 = arith.constant 0 : index
    %c0_91 = arith.constant 0 : index
    %187 = vector.load %arg2[%186, %c0_90, %c0_91] : memref<20x1x128xf32, #tpu.memory_space<vmem>>, vector<1x1x128xf32>
    %188 = vector.shape_cast %187 : vector<1x1x128xf32> to vector<1x128xf32>
    %c46 = arith.constant 46 : index
    %189 = memref.load %arg1[%c46] : memref<64xi32, #tpu.memory_space<smem>>
    %190 = arith.index_cast %189 : i32 to index
    %c0_92 = arith.constant 0 : index
    %c0_93 = arith.constant 0 : index
    %191 = vector.load %arg2[%190, %c0_92, %c0_93] : memref<20x1x128xf32, #tpu.memory_space<vmem>>, vector<1x1x128xf32>
    %192 = vector.shape_cast %191 : vector<1x1x128xf32> to vector<1x128xf32>
    %c47 = arith.constant 47 : index
    %193 = memref.load %arg1[%c47] : memref<64xi32, #tpu.memory_space<smem>>
    %194 = arith.index_cast %193 : i32 to index
    %c0_94 = arith.constant 0 : index
    %c0_95 = arith.constant 0 : index
    %195 = vector.load %arg2[%194, %c0_94, %c0_95] : memref<20x1x128xf32, #tpu.memory_space<vmem>>, vector<1x1x128xf32>
    %196 = vector.shape_cast %195 : vector<1x1x128xf32> to vector<1x128xf32>
    %197 = tpu.concatenate %168, %172, %176, %180, %184, %188, %192, %196 in 0 : vector<1x128xf32>, vector<1x128xf32>, vector<1x128xf32>, vector<1x128xf32>, vector<1x128xf32>, vector<1x128xf32>, vector<1x128xf32>, vector<1x128xf32> -> vector<8x128xf32>
    %c48 = arith.constant 48 : index
    %198 = memref.load %arg1[%c48] : memref<64xi32, #tpu.memory_space<smem>>
    %199 = arith.index_cast %198 : i32 to index
    %c0_96 = arith.constant 0 : index
    %c0_97 = arith.constant 0 : index
    %200 = vector.load %arg2[%199, %c0_96, %c0_97] : memref<20x1x128xf32, #tpu.memory_space<vmem>>, vector<1x1x128xf32>
    %201 = vector.shape_cast %200 : vector<1x1x128xf32> to vector<1x128xf32>
    %c49 = arith.constant 49 : index
    %202 = memref.load %arg1[%c49] : memref<64xi32, #tpu.memory_space<smem>>
    %203 = arith.index_cast %202 : i32 to index
    %c0_98 = arith.constant 0 : index
    %c0_99 = arith.constant 0 : index
    %204 = vector.load %arg2[%203, %c0_98, %c0_99] : memref<20x1x128xf32, #tpu.memory_space<vmem>>, vector<1x1x128xf32>
    %205 = vector.shape_cast %204 : vector<1x1x128xf32> to vector<1x128xf32>
    %c50 = arith.constant 50 : index
    %206 = memref.load %arg1[%c50] : memref<64xi32, #tpu.memory_space<smem>>
    %207 = arith.index_cast %206 : i32 to index
    %c0_100 = arith.constant 0 : index
    %c0_101 = arith.constant 0 : index
    %208 = vector.load %arg2[%207, %c0_100, %c0_101] : memref<20x1x128xf32, #tpu.memory_space<vmem>>, vector<1x1x128xf32>
    %209 = vector.shape_cast %208 : vector<1x1x128xf32> to vector<1x128xf32>
    %c51 = arith.constant 51 : index
    %210 = memref.load %arg1[%c51] : memref<64xi32, #tpu.memory_space<smem>>
    %211 = arith.index_cast %210 : i32 to index
    %c0_102 = arith.constant 0 : index
    %c0_103 = arith.constant 0 : index
    %212 = vector.load %arg2[%211, %c0_102, %c0_103] : memref<20x1x128xf32, #tpu.memory_space<vmem>>, vector<1x1x128xf32>
    %213 = vector.shape_cast %212 : vector<1x1x128xf32> to vector<1x128xf32>
    %c52 = arith.constant 52 : index
    %214 = memref.load %arg1[%c52] : memref<64xi32, #tpu.memory_space<smem>>
    %215 = arith.index_cast %214 : i32 to index
    %c0_104 = arith.constant 0 : index
    %c0_105 = arith.constant 0 : index
    %216 = vector.load %arg2[%215, %c0_104, %c0_105] : memref<20x1x128xf32, #tpu.memory_space<vmem>>, vector<1x1x128xf32>
    %217 = vector.shape_cast %216 : vector<1x1x128xf32> to vector<1x128xf32>
    %c53 = arith.constant 53 : index
    %218 = memref.load %arg1[%c53] : memref<64xi32, #tpu.memory_space<smem>>
    %219 = arith.index_cast %218 : i32 to index
    %c0_106 = arith.constant 0 : index
    %c0_107 = arith.constant 0 : index
    %220 = vector.load %arg2[%219, %c0_106, %c0_107] : memref<20x1x128xf32, #tpu.memory_space<vmem>>, vector<1x1x128xf32>
    %221 = vector.shape_cast %220 : vector<1x1x128xf32> to vector<1x128xf32>
    %c54 = arith.constant 54 : index
    %222 = memref.load %arg1[%c54] : memref<64xi32, #tpu.memory_space<smem>>
    %223 = arith.index_cast %222 : i32 to index
    %c0_108 = arith.constant 0 : index
    %c0_109 = arith.constant 0 : index
    %224 = vector.load %arg2[%223, %c0_108, %c0_109] : memref<20x1x128xf32, #tpu.memory_space<vmem>>, vector<1x1x128xf32>
    %225 = vector.shape_cast %224 : vector<1x1x128xf32> to vector<1x128xf32>
    %c55 = arith.constant 55 : index
    %226 = memref.load %arg1[%c55] : memref<64xi32, #tpu.memory_space<smem>>
    %227 = arith.index_cast %226 : i32 to index
    %c0_110 = arith.constant 0 : index
    %c0_111 = arith.constant 0 : index
    %228 = vector.load %arg2[%227, %c0_110, %c0_111] : memref<20x1x128xf32, #tpu.memory_space<vmem>>, vector<1x1x128xf32>
    %229 = vector.shape_cast %228 : vector<1x1x128xf32> to vector<1x128xf32>
    %230 = tpu.concatenate %201, %205, %209, %213, %217, %221, %225, %229 in 0 : vector<1x128xf32>, vector<1x128xf32>, vector<1x128xf32>, vector<1x128xf32>, vector<1x128xf32>, vector<1x128xf32>, vector<1x128xf32>, vector<1x128xf32> -> vector<8x128xf32>
    %c56 = arith.constant 56 : index
    %231 = memref.load %arg1[%c56] : memref<64xi32, #tpu.memory_space<smem>>
    %232 = arith.index_cast %231 : i32 to index
    %c0_112 = arith.constant 0 : index
    %c0_113 = arith.constant 0 : index
    %233 = vector.load %arg2[%232, %c0_112, %c0_113] : memref<20x1x128xf32, #tpu.memory_space<vmem>>, vector<1x1x128xf32>
    %234 = vector.shape_cast %233 : vector<1x1x128xf32> to vector<1x128xf32>
    %c57 = arith.constant 57 : index
    %235 = memref.load %arg1[%c57] : memref<64xi32, #tpu.memory_space<smem>>
    %236 = arith.index_cast %235 : i32 to index
    %c0_114 = arith.constant 0 : index
    %c0_115 = arith.constant 0 : index
    %237 = vector.load %arg2[%236, %c0_114, %c0_115] : memref<20x1x128xf32, #tpu.memory_space<vmem>>, vector<1x1x128xf32>
    %238 = vector.shape_cast %237 : vector<1x1x128xf32> to vector<1x128xf32>
    %c58 = arith.constant 58 : index
    %239 = memref.load %arg1[%c58] : memref<64xi32, #tpu.memory_space<smem>>
    %240 = arith.index_cast %239 : i32 to index
    %c0_116 = arith.constant 0 : index
    %c0_117 = arith.constant 0 : index
    %241 = vector.load %arg2[%240, %c0_116, %c0_117] : memref<20x1x128xf32, #tpu.memory_space<vmem>>, vector<1x1x128xf32>
    %242 = vector.shape_cast %241 : vector<1x1x128xf32> to vector<1x128xf32>
    %c59 = arith.constant 59 : index
    %243 = memref.load %arg1[%c59] : memref<64xi32, #tpu.memory_space<smem>>
    %244 = arith.index_cast %243 : i32 to index
    %c0_118 = arith.constant 0 : index
    %c0_119 = arith.constant 0 : index
    %245 = vector.load %arg2[%244, %c0_118, %c0_119] : memref<20x1x128xf32, #tpu.memory_space<vmem>>, vector<1x1x128xf32>
    %246 = vector.shape_cast %245 : vector<1x1x128xf32> to vector<1x128xf32>
    %c60 = arith.constant 60 : index
    %247 = memref.load %arg1[%c60] : memref<64xi32, #tpu.memory_space<smem>>
    %248 = arith.index_cast %247 : i32 to index
    %c0_120 = arith.constant 0 : index
    %c0_121 = arith.constant 0 : index
    %249 = vector.load %arg2[%248, %c0_120, %c0_121] : memref<20x1x128xf32, #tpu.memory_space<vmem>>, vector<1x1x128xf32>
    %250 = vector.shape_cast %249 : vector<1x1x128xf32> to vector<1x128xf32>
    %c61 = arith.constant 61 : index
    %251 = memref.load %arg1[%c61] : memref<64xi32, #tpu.memory_space<smem>>
    %252 = arith.index_cast %251 : i32 to index
    %c0_122 = arith.constant 0 : index
    %c0_123 = arith.constant 0 : index
    %253 = vector.load %arg2[%252, %c0_122, %c0_123] : memref<20x1x128xf32, #tpu.memory_space<vmem>>, vector<1x1x128xf32>
    %254 = vector.shape_cast %253 : vector<1x1x128xf32> to vector<1x128xf32>
    %c62 = arith.constant 62 : index
    %255 = memref.load %arg1[%c62] : memref<64xi32, #tpu.memory_space<smem>>
    %256 = arith.index_cast %255 : i32 to index
    %c0_124 = arith.constant 0 : index
    %c0_125 = arith.constant 0 : index
    %257 = vector.load %arg2[%256, %c0_124, %c0_125] : memref<20x1x128xf32, #tpu.memory_space<vmem>>, vector<1x1x128xf32>
    %258 = vector.shape_cast %257 : vector<1x1x128xf32> to vector<1x128xf32>
    %c63 = arith.constant 63 : index
    %259 = memref.load %arg1[%c63] : memref<64xi32, #tpu.memory_space<smem>>
    %260 = arith.index_cast %259 : i32 to index
    %c0_126 = arith.constant 0 : index
    %c0_127 = arith.constant 0 : index
    %261 = vector.load %arg2[%260, %c0_126, %c0_127] : memref<20x1x128xf32, #tpu.memory_space<vmem>>, vector<1x1x128xf32>
    %262 = vector.shape_cast %261 : vector<1x1x128xf32> to vector<1x128xf32>
    %263 = tpu.concatenate %234, %238, %242, %246, %250, %254, %258, %262 in 0 : vector<1x128xf32>, vector<1x128xf32>, vector<1x128xf32>, vector<1x128xf32>, vector<1x128xf32>, vector<1x128xf32>, vector<1x128xf32>, vector<1x128xf32> -> vector<8x128xf32>
    %c0_128 = arith.constant 0 : index
    %c0_129 = arith.constant 0 : index
    %264 = vector.load %arg4[%c0_128, %c0_129] : memref<32x128xbf16, #tpu.memory_space<vmem>>, vector<32x128xbf16>
    %c0_130 = arith.constant 0 : index
    %c0_131 = arith.constant 0 : index
    %265 = vector.load %arg3[%c0_130, %c0_131] : memref<1x128xf32, #tpu.memory_space<vmem>>, vector<1x128xf32>
    %cst = arith.constant 0.000000e+00 : f32
    %266 = vector.broadcast %cst : f32 to vector<8x32xf32>
    %267 = vector.broadcast %265 : vector<1x128xf32> to vector<8x128xf32>
    %268 = arith.addf %32, %267 : vector<8x128xf32>
    %269 = vector.extract_strided_slice %268 {offsets = [0, 0], sizes = [8, 32], strides = [1, 1]} : vector<8x128xf32> to vector<8x32xf32>
    %270 = arith.negf %269 : vector<8x32xf32>
    %271 = math.exp %270 : vector<8x32xf32>
    %cst_132 = arith.constant 1.000000e+00 : f32
    %272 = vector.broadcast %cst_132 : f32 to vector<8x32xf32>
    %273 = arith.addf %272, %271 : vector<8x32xf32>
    %274 = arith.divf %272, %273 : vector<8x32xf32>
    %275 = vector.extract_strided_slice %268 {offsets = [0, 32], sizes = [8, 32], strides = [1, 1]} : vector<8x128xf32> to vector<8x32xf32>
    %276 = arith.negf %275 : vector<8x32xf32>
    %277 = math.exp %276 : vector<8x32xf32>
    %cst_133 = arith.constant 1.000000e+00 : f32
    %278 = vector.broadcast %cst_133 : f32 to vector<8x32xf32>
    %279 = arith.addf %278, %277 : vector<8x32xf32>
    %280 = arith.divf %278, %279 : vector<8x32xf32>
    %281 = vector.extract_strided_slice %268 {offsets = [0, 64], sizes = [8, 32], strides = [1, 1]} : vector<8x128xf32> to vector<8x32xf32>
    %282 = math.tanh %281 : vector<8x32xf32>
    %283 = vector.extract_strided_slice %268 {offsets = [0, 96], sizes = [8, 32], strides = [1, 1]} : vector<8x128xf32> to vector<8x32xf32>
    %284 = arith.negf %283 : vector<8x32xf32>
    %285 = math.exp %284 : vector<8x32xf32>
    %cst_134 = arith.constant 1.000000e+00 : f32
    %286 = vector.broadcast %cst_134 : f32 to vector<8x32xf32>
    %287 = arith.addf %286, %285 : vector<8x32xf32>
    %288 = arith.divf %286, %287 : vector<8x32xf32>
    %289 = arith.mulf %280, %266 : vector<8x32xf32>
    %290 = arith.mulf %274, %282 : vector<8x32xf32>
    %291 = arith.addf %289, %290 : vector<8x32xf32>
    %292 = math.tanh %291 : vector<8x32xf32>
    %293 = arith.mulf %288, %292 : vector<8x32xf32>
    %294 = arith.truncf %293 : vector<8x32xf32> to vector<8x32xbf16>
    %295 = vector.broadcast %265 : vector<1x128xf32> to vector<8x128xf32>
    %296 = arith.addf %65, %295 : vector<8x128xf32>
    %cst_135 = arith.constant dense<0.000000e+00> : vector<8x128xf32>
    %297 = tpu.matmul %294, %264, %cst_135 {dimension_numbers = #tpu.dot_dimension_numbers<[1], [0], [0], [1], [0, 0, 1, 1], [], []>} : vector<8x32xbf16>, vector<32x128xbf16>, vector<8x128xf32> -> vector<8x128xf32>
    %298 = arith.addf %296, %297 : vector<8x128xf32>
    %299 = vector.extract_strided_slice %298 {offsets = [0, 0], sizes = [8, 32], strides = [1, 1]} : vector<8x128xf32> to vector<8x32xf32>
    %300 = arith.negf %299 : vector<8x32xf32>
    %301 = math.exp %300 : vector<8x32xf32>
    %cst_136 = arith.constant 1.000000e+00 : f32
    %302 = vector.broadcast %cst_136 : f32 to vector<8x32xf32>
    %303 = arith.addf %302, %301 : vector<8x32xf32>
    %304 = arith.divf %302, %303 : vector<8x32xf32>
    %305 = vector.extract_strided_slice %298 {offsets = [0, 32], sizes = [8, 32], strides = [1, 1]} : vector<8x128xf32> to vector<8x32xf32>
    %306 = arith.negf %305 : vector<8x32xf32>
    %307 = math.exp %306 : vector<8x32xf32>
    %cst_137 = arith.constant 1.000000e+00 : f32
    %308 = vector.broadcast %cst_137 : f32 to vector<8x32xf32>
    %309 = arith.addf %308, %307 : vector<8x32xf32>
    %310 = arith.divf %308, %309 : vector<8x32xf32>
    %311 = vector.extract_strided_slice %298 {offsets = [0, 64], sizes = [8, 32], strides = [1, 1]} : vector<8x128xf32> to vector<8x32xf32>
    %312 = math.tanh %311 : vector<8x32xf32>
    %313 = vector.extract_strided_slice %298 {offsets = [0, 96], sizes = [8, 32], strides = [1, 1]} : vector<8x128xf32> to vector<8x32xf32>
    %314 = arith.negf %313 : vector<8x32xf32>
    %315 = math.exp %314 : vector<8x32xf32>
    %cst_138 = arith.constant 1.000000e+00 : f32
    %316 = vector.broadcast %cst_138 : f32 to vector<8x32xf32>
    %317 = arith.addf %316, %315 : vector<8x32xf32>
    %318 = arith.divf %316, %317 : vector<8x32xf32>
    %319 = arith.mulf %310, %291 : vector<8x32xf32>
    %320 = arith.mulf %304, %312 : vector<8x32xf32>
    %321 = arith.addf %319, %320 : vector<8x32xf32>
    %322 = math.tanh %321 : vector<8x32xf32>
    %323 = arith.mulf %318, %322 : vector<8x32xf32>
    %324 = arith.truncf %323 : vector<8x32xf32> to vector<8x32xbf16>
    %325 = vector.broadcast %265 : vector<1x128xf32> to vector<8x128xf32>
    %326 = arith.addf %98, %325 : vector<8x128xf32>
    %cst_139 = arith.constant dense<0.000000e+00> : vector<8x128xf32>
    %327 = tpu.matmul %324, %264, %cst_139 {dimension_numbers = #tpu.dot_dimension_numbers<[1], [0], [0], [1], [0, 0, 1, 1], [], []>} : vector<8x32xbf16>, vector<32x128xbf16>, vector<8x128xf32> -> vector<8x128xf32>
    %328 = arith.addf %326, %327 : vector<8x128xf32>
    %329 = vector.extract_strided_slice %328 {offsets = [0, 0], sizes = [8, 32], strides = [1, 1]} : vector<8x128xf32> to vector<8x32xf32>
    %330 = arith.negf %329 : vector<8x32xf32>
    %331 = math.exp %330 : vector<8x32xf32>
    %cst_140 = arith.constant 1.000000e+00 : f32
    %332 = vector.broadcast %cst_140 : f32 to vector<8x32xf32>
    %333 = arith.addf %332, %331 : vector<8x32xf32>
    %334 = arith.divf %332, %333 : vector<8x32xf32>
    %335 = vector.extract_strided_slice %328 {offsets = [0, 32], sizes = [8, 32], strides = [1, 1]} : vector<8x128xf32> to vector<8x32xf32>
    %336 = arith.negf %335 : vector<8x32xf32>
    %337 = math.exp %336 : vector<8x32xf32>
    %cst_141 = arith.constant 1.000000e+00 : f32
    %338 = vector.broadcast %cst_141 : f32 to vector<8x32xf32>
    %339 = arith.addf %338, %337 : vector<8x32xf32>
    %340 = arith.divf %338, %339 : vector<8x32xf32>
    %341 = vector.extract_strided_slice %328 {offsets = [0, 64], sizes = [8, 32], strides = [1, 1]} : vector<8x128xf32> to vector<8x32xf32>
    %342 = math.tanh %341 : vector<8x32xf32>
    %343 = vector.extract_strided_slice %328 {offsets = [0, 96], sizes = [8, 32], strides = [1, 1]} : vector<8x128xf32> to vector<8x32xf32>
    %344 = arith.negf %343 : vector<8x32xf32>
    %345 = math.exp %344 : vector<8x32xf32>
    %cst_142 = arith.constant 1.000000e+00 : f32
    %346 = vector.broadcast %cst_142 : f32 to vector<8x32xf32>
    %347 = arith.addf %346, %345 : vector<8x32xf32>
    %348 = arith.divf %346, %347 : vector<8x32xf32>
    %349 = arith.mulf %340, %321 : vector<8x32xf32>
    %350 = arith.mulf %334, %342 : vector<8x32xf32>
    %351 = arith.addf %349, %350 : vector<8x32xf32>
    %352 = math.tanh %351 : vector<8x32xf32>
    %353 = arith.mulf %348, %352 : vector<8x32xf32>
    %354 = arith.truncf %353 : vector<8x32xf32> to vector<8x32xbf16>
    %355 = vector.broadcast %265 : vector<1x128xf32> to vector<8x128xf32>
    %356 = arith.addf %131, %355 : vector<8x128xf32>
    %cst_143 = arith.constant dense<0.000000e+00> : vector<8x128xf32>
    %357 = tpu.matmul %354, %264, %cst_143 {dimension_numbers = #tpu.dot_dimension_numbers<[1], [0], [0], [1], [0, 0, 1, 1], [], []>} : vector<8x32xbf16>, vector<32x128xbf16>, vector<8x128xf32> -> vector<8x128xf32>
    %358 = arith.addf %356, %357 : vector<8x128xf32>
    %359 = vector.extract_strided_slice %358 {offsets = [0, 0], sizes = [8, 32], strides = [1, 1]} : vector<8x128xf32> to vector<8x32xf32>
    %360 = arith.negf %359 : vector<8x32xf32>
    %361 = math.exp %360 : vector<8x32xf32>
    %cst_144 = arith.constant 1.000000e+00 : f32
    %362 = vector.broadcast %cst_144 : f32 to vector<8x32xf32>
    %363 = arith.addf %362, %361 : vector<8x32xf32>
    %364 = arith.divf %362, %363 : vector<8x32xf32>
    %365 = vector.extract_strided_slice %358 {offsets = [0, 32], sizes = [8, 32], strides = [1, 1]} : vector<8x128xf32> to vector<8x32xf32>
    %366 = arith.negf %365 : vector<8x32xf32>
    %367 = math.exp %366 : vector<8x32xf32>
    %cst_145 = arith.constant 1.000000e+00 : f32
    %368 = vector.broadcast %cst_145 : f32 to vector<8x32xf32>
    %369 = arith.addf %368, %367 : vector<8x32xf32>
    %370 = arith.divf %368, %369 : vector<8x32xf32>
    %371 = vector.extract_strided_slice %358 {offsets = [0, 64], sizes = [8, 32], strides = [1, 1]} : vector<8x128xf32> to vector<8x32xf32>
    %372 = math.tanh %371 : vector<8x32xf32>
    %373 = vector.extract_strided_slice %358 {offsets = [0, 96], sizes = [8, 32], strides = [1, 1]} : vector<8x128xf32> to vector<8x32xf32>
    %374 = arith.negf %373 : vector<8x32xf32>
    %375 = math.exp %374 : vector<8x32xf32>
    %cst_146 = arith.constant 1.000000e+00 : f32
    %376 = vector.broadcast %cst_146 : f32 to vector<8x32xf32>
    %377 = arith.addf %376, %375 : vector<8x32xf32>
    %378 = arith.divf %376, %377 : vector<8x32xf32>
    %379 = arith.mulf %370, %351 : vector<8x32xf32>
    %380 = arith.mulf %364, %372 : vector<8x32xf32>
    %381 = arith.addf %379, %380 : vector<8x32xf32>
    %382 = math.tanh %381 : vector<8x32xf32>
    %383 = arith.mulf %378, %382 : vector<8x32xf32>
    %384 = arith.truncf %383 : vector<8x32xf32> to vector<8x32xbf16>
    %385 = vector.broadcast %265 : vector<1x128xf32> to vector<8x128xf32>
    %386 = arith.addf %164, %385 : vector<8x128xf32>
    %cst_147 = arith.constant dense<0.000000e+00> : vector<8x128xf32>
    %387 = tpu.matmul %384, %264, %cst_147 {dimension_numbers = #tpu.dot_dimension_numbers<[1], [0], [0], [1], [0, 0, 1, 1], [], []>} : vector<8x32xbf16>, vector<32x128xbf16>, vector<8x128xf32> -> vector<8x128xf32>
    %388 = arith.addf %386, %387 : vector<8x128xf32>
    %389 = vector.extract_strided_slice %388 {offsets = [0, 0], sizes = [8, 32], strides = [1, 1]} : vector<8x128xf32> to vector<8x32xf32>
    %390 = arith.negf %389 : vector<8x32xf32>
    %391 = math.exp %390 : vector<8x32xf32>
    %cst_148 = arith.constant 1.000000e+00 : f32
    %392 = vector.broadcast %cst_148 : f32 to vector<8x32xf32>
    %393 = arith.addf %392, %391 : vector<8x32xf32>
    %394 = arith.divf %392, %393 : vector<8x32xf32>
    %395 = vector.extract_strided_slice %388 {offsets = [0, 32], sizes = [8, 32], strides = [1, 1]} : vector<8x128xf32> to vector<8x32xf32>
    %396 = arith.negf %395 : vector<8x32xf32>
    %397 = math.exp %396 : vector<8x32xf32>
    %cst_149 = arith.constant 1.000000e+00 : f32
    %398 = vector.broadcast %cst_149 : f32 to vector<8x32xf32>
    %399 = arith.addf %398, %397 : vector<8x32xf32>
    %400 = arith.divf %398, %399 : vector<8x32xf32>
    %401 = vector.extract_strided_slice %388 {offsets = [0, 64], sizes = [8, 32], strides = [1, 1]} : vector<8x128xf32> to vector<8x32xf32>
    %402 = math.tanh %401 : vector<8x32xf32>
    %403 = vector.extract_strided_slice %388 {offsets = [0, 96], sizes = [8, 32], strides = [1, 1]} : vector<8x128xf32> to vector<8x32xf32>
    %404 = arith.negf %403 : vector<8x32xf32>
    %405 = math.exp %404 : vector<8x32xf32>
    %cst_150 = arith.constant 1.000000e+00 : f32
    %406 = vector.broadcast %cst_150 : f32 to vector<8x32xf32>
    %407 = arith.addf %406, %405 : vector<8x32xf32>
    %408 = arith.divf %406, %407 : vector<8x32xf32>
    %409 = arith.mulf %400, %381 : vector<8x32xf32>
    %410 = arith.mulf %394, %402 : vector<8x32xf32>
    %411 = arith.addf %409, %410 : vector<8x32xf32>
    %412 = math.tanh %411 : vector<8x32xf32>
    %413 = arith.mulf %408, %412 : vector<8x32xf32>
    %414 = arith.truncf %413 : vector<8x32xf32> to vector<8x32xbf16>
    %415 = vector.broadcast %265 : vector<1x128xf32> to vector<8x128xf32>
    %416 = arith.addf %197, %415 : vector<8x128xf32>
    %cst_151 = arith.constant dense<0.000000e+00> : vector<8x128xf32>
    %417 = tpu.matmul %414, %264, %cst_151 {dimension_numbers = #tpu.dot_dimension_numbers<[1], [0], [0], [1], [0, 0, 1, 1], [], []>} : vector<8x32xbf16>, vector<32x128xbf16>, vector<8x128xf32> -> vector<8x128xf32>
    %418 = arith.addf %416, %417 : vector<8x128xf32>
    %419 = vector.extract_strided_slice %418 {offsets = [0, 0], sizes = [8, 32], strides = [1, 1]} : vector<8x128xf32> to vector<8x32xf32>
    %420 = arith.negf %419 : vector<8x32xf32>
    %421 = math.exp %420 : vector<8x32xf32>
    %cst_152 = arith.constant 1.000000e+00 : f32
    %422 = vector.broadcast %cst_152 : f32 to vector<8x32xf32>
    %423 = arith.addf %422, %421 : vector<8x32xf32>
    %424 = arith.divf %422, %423 : vector<8x32xf32>
    %425 = vector.extract_strided_slice %418 {offsets = [0, 32], sizes = [8, 32], strides = [1, 1]} : vector<8x128xf32> to vector<8x32xf32>
    %426 = arith.negf %425 : vector<8x32xf32>
    %427 = math.exp %426 : vector<8x32xf32>
    %cst_153 = arith.constant 1.000000e+00 : f32
    %428 = vector.broadcast %cst_153 : f32 to vector<8x32xf32>
    %429 = arith.addf %428, %427 : vector<8x32xf32>
    %430 = arith.divf %428, %429 : vector<8x32xf32>
    %431 = vector.extract_strided_slice %418 {offsets = [0, 64], sizes = [8, 32], strides = [1, 1]} : vector<8x128xf32> to vector<8x32xf32>
    %432 = math.tanh %431 : vector<8x32xf32>
    %433 = vector.extract_strided_slice %418 {offsets = [0, 96], sizes = [8, 32], strides = [1, 1]} : vector<8x128xf32> to vector<8x32xf32>
    %434 = arith.negf %433 : vector<8x32xf32>
    %435 = math.exp %434 : vector<8x32xf32>
    %cst_154 = arith.constant 1.000000e+00 : f32
    %436 = vector.broadcast %cst_154 : f32 to vector<8x32xf32>
    %437 = arith.addf %436, %435 : vector<8x32xf32>
    %438 = arith.divf %436, %437 : vector<8x32xf32>
    %439 = arith.mulf %430, %411 : vector<8x32xf32>
    %440 = arith.mulf %424, %432 : vector<8x32xf32>
    %441 = arith.addf %439, %440 : vector<8x32xf32>
    %442 = math.tanh %441 : vector<8x32xf32>
    %443 = arith.mulf %438, %442 : vector<8x32xf32>
    %444 = arith.truncf %443 : vector<8x32xf32> to vector<8x32xbf16>
    %445 = vector.broadcast %265 : vector<1x128xf32> to vector<8x128xf32>
    %446 = arith.addf %230, %445 : vector<8x128xf32>
    %cst_155 = arith.constant dense<0.000000e+00> : vector<8x128xf32>
    %447 = tpu.matmul %444, %264, %cst_155 {dimension_numbers = #tpu.dot_dimension_numbers<[1], [0], [0], [1], [0, 0, 1, 1], [], []>} : vector<8x32xbf16>, vector<32x128xbf16>, vector<8x128xf32> -> vector<8x128xf32>
    %448 = arith.addf %446, %447 : vector<8x128xf32>
    %449 = vector.extract_strided_slice %448 {offsets = [0, 0], sizes = [8, 32], strides = [1, 1]} : vector<8x128xf32> to vector<8x32xf32>
    %450 = arith.negf %449 : vector<8x32xf32>
    %451 = math.exp %450 : vector<8x32xf32>
    %cst_156 = arith.constant 1.000000e+00 : f32
    %452 = vector.broadcast %cst_156 : f32 to vector<8x32xf32>
    %453 = arith.addf %452, %451 : vector<8x32xf32>
    %454 = arith.divf %452, %453 : vector<8x32xf32>
    %455 = vector.extract_strided_slice %448 {offsets = [0, 32], sizes = [8, 32], strides = [1, 1]} : vector<8x128xf32> to vector<8x32xf32>
    %456 = arith.negf %455 : vector<8x32xf32>
    %457 = math.exp %456 : vector<8x32xf32>
    %cst_157 = arith.constant 1.000000e+00 : f32
    %458 = vector.broadcast %cst_157 : f32 to vector<8x32xf32>
    %459 = arith.addf %458, %457 : vector<8x32xf32>
    %460 = arith.divf %458, %459 : vector<8x32xf32>
    %461 = vector.extract_strided_slice %448 {offsets = [0, 64], sizes = [8, 32], strides = [1, 1]} : vector<8x128xf32> to vector<8x32xf32>
    %462 = math.tanh %461 : vector<8x32xf32>
    %463 = vector.extract_strided_slice %448 {offsets = [0, 96], sizes = [8, 32], strides = [1, 1]} : vector<8x128xf32> to vector<8x32xf32>
    %464 = arith.negf %463 : vector<8x32xf32>
    %465 = math.exp %464 : vector<8x32xf32>
    %cst_158 = arith.constant 1.000000e+00 : f32
    %466 = vector.broadcast %cst_158 : f32 to vector<8x32xf32>
    %467 = arith.addf %466, %465 : vector<8x32xf32>
    %468 = arith.divf %466, %467 : vector<8x32xf32>
    %469 = arith.mulf %460, %441 : vector<8x32xf32>
    %470 = arith.mulf %454, %462 : vector<8x32xf32>
    %471 = arith.addf %469, %470 : vector<8x32xf32>
    %472 = math.tanh %471 : vector<8x32xf32>
    %473 = arith.mulf %468, %472 : vector<8x32xf32>
    %474 = arith.truncf %473 : vector<8x32xf32> to vector<8x32xbf16>
    %475 = vector.broadcast %265 : vector<1x128xf32> to vector<8x128xf32>
    %476 = arith.addf %263, %475 : vector<8x128xf32>
    %cst_159 = arith.constant dense<0.000000e+00> : vector<8x128xf32>
    %477 = tpu.matmul %474, %264, %cst_159 {dimension_numbers = #tpu.dot_dimension_numbers<[1], [0], [0], [1], [0, 0, 1, 1], [], []>} : vector<8x32xbf16>, vector<32x128xbf16>, vector<8x128xf32> -> vector<8x128xf32>
    %478 = arith.addf %476, %477 : vector<8x128xf32>
    %479 = vector.extract_strided_slice %478 {offsets = [0, 0], sizes = [8, 32], strides = [1, 1]} : vector<8x128xf32> to vector<8x32xf32>
    %480 = arith.negf %479 : vector<8x32xf32>
    %481 = math.exp %480 : vector<8x32xf32>
    %cst_160 = arith.constant 1.000000e+00 : f32
    %482 = vector.broadcast %cst_160 : f32 to vector<8x32xf32>
    %483 = arith.addf %482, %481 : vector<8x32xf32>
    %484 = arith.divf %482, %483 : vector<8x32xf32>
    %485 = vector.extract_strided_slice %478 {offsets = [0, 32], sizes = [8, 32], strides = [1, 1]} : vector<8x128xf32> to vector<8x32xf32>
    %486 = arith.negf %485 : vector<8x32xf32>
    %487 = math.exp %486 : vector<8x32xf32>
    %cst_161 = arith.constant 1.000000e+00 : f32
    %488 = vector.broadcast %cst_161 : f32 to vector<8x32xf32>
    %489 = arith.addf %488, %487 : vector<8x32xf32>
    %490 = arith.divf %488, %489 : vector<8x32xf32>
    %491 = vector.extract_strided_slice %478 {offsets = [0, 64], sizes = [8, 32], strides = [1, 1]} : vector<8x128xf32> to vector<8x32xf32>
    %492 = math.tanh %491 : vector<8x32xf32>
    %493 = vector.extract_strided_slice %478 {offsets = [0, 96], sizes = [8, 32], strides = [1, 1]} : vector<8x128xf32> to vector<8x32xf32>
    %494 = arith.negf %493 : vector<8x32xf32>
    %495 = math.exp %494 : vector<8x32xf32>
    %cst_162 = arith.constant 1.000000e+00 : f32
    %496 = vector.broadcast %cst_162 : f32 to vector<8x32xf32>
    %497 = arith.addf %496, %495 : vector<8x32xf32>
    %498 = arith.divf %496, %497 : vector<8x32xf32>
    %499 = arith.mulf %490, %471 : vector<8x32xf32>
    %500 = arith.mulf %484, %492 : vector<8x32xf32>
    %501 = arith.addf %499, %500 : vector<8x32xf32>
    %502 = math.tanh %501 : vector<8x32xf32>
    %503 = arith.mulf %498, %502 : vector<8x32xf32>
    %504 = tpu.concatenate %293, %323, %353, %383, %413, %443, %473, %503 in 0 : vector<8x32xf32>, vector<8x32xf32>, vector<8x32xf32>, vector<8x32xf32>, vector<8x32xf32>, vector<8x32xf32>, vector<8x32xf32>, vector<8x32xf32> -> vector<64x32xf32>
    %505 = arith.truncf %504 : vector<64x32xf32> to vector<64x32xbf16>
    %c0_163 = arith.constant 0 : index
    %c0_164 = arith.constant 0 : index
    %506 = vector.load %arg5[%c0_163, %c0_164] : memref<32x32xbf16, #tpu.memory_space<vmem>>, vector<32x32xbf16>
    %cst_165 = arith.constant dense<0.000000e+00> : vector<64x32xf32>
    %507 = tpu.matmul %505, %506, %cst_165 {dimension_numbers = #tpu.dot_dimension_numbers<[1], [0], [0], [1], [0, 0, 1, 1], [], []>} : vector<64x32xbf16>, vector<32x32xbf16>, vector<64x32xf32> -> vector<64x32xf32>
    %508 = arith.truncf %501 : vector<8x32xf32> to vector<8x32xbf16>
    %c0_166 = arith.constant 0 : index
    %c0_167 = arith.constant 0 : index
    %509 = vector.load %arg6[%c0_166, %c0_167] : memref<32x32xbf16, #tpu.memory_space<vmem>>, vector<32x32xbf16>
    %cst_168 = arith.constant dense<0.000000e+00> : vector<8x32xf32>
    %510 = tpu.matmul %508, %509, %cst_168 {dimension_numbers = #tpu.dot_dimension_numbers<[1], [0], [0], [1], [0, 0, 1, 1], [], []>} : vector<8x32xbf16>, vector<32x32xbf16>, vector<8x32xf32> -> vector<8x32xf32>
    %c0_169 = arith.constant 0 : index
    %c0_170 = arith.constant 0 : index
    %511 = vector.load %arg7[%c0_169, %c0_170] : memref<1x32xf32, #tpu.memory_space<vmem>>, vector<1x32xf32>
    %512 = vector.broadcast %511 : vector<1x32xf32> to vector<8x32xf32>
    %513 = arith.addf %510, %512 : vector<8x32xf32>
    %c0_171 = arith.constant 0 : index
    %c0_172 = arith.constant 0 : index
    %514 = vector.load %arg8[%c0_171, %c0_172] : memref<1x32xf32, #tpu.memory_space<vmem>>, vector<1x32xf32>
    %515 = tpu.iota {dimensions = array<i32: 1>} : vector<8x8xi32>
    %cst_173 = arith.constant 0.000000e+00 : f32
    %516 = vector.broadcast %cst_173 : f32 to vector<8x8xf32>
    %517 = vector.extract_strided_slice %507 {offsets = [0, 0], sizes = [8, 32], strides = [1, 1]} : vector<64x32xf32> to vector<8x32xf32>
    %518 = arith.addf %517, %513 : vector<8x32xf32>
    %519 = math.tanh %518 : vector<8x32xf32>
    %520 = vector.broadcast %514 : vector<1x32xf32> to vector<8x32xf32>
    %521 = arith.mulf %519, %520 : vector<8x32xf32>
    %cst_174 = arith.constant dense<0.000000e+00> : vector<8xf32>
    %522 = vector.multi_reduction <add>, %521, %cst_174 [1] : vector<8x32xf32> to vector<8xf32>
    %523 = vector.shape_cast %522 : vector<8xf32> to vector<8x1xf32>
    %c0_i32 = arith.constant 0 : i32
    %524 = vector.broadcast %c0_i32 : i32 to vector<8x8xi32>
    %525 = arith.cmpi eq, %515, %524 : vector<8x8xi32>
    %526 = vector.shape_cast %523 : vector<8x1xf32> to vector<8x1xf32>
    %527 = vector.broadcast %526 : vector<8x1xf32> to vector<8x8xf32>
    %528 = arith.select %525, %527, %516 : vector<8x8xi1>, vector<8x8xf32>
    %529 = vector.extract_strided_slice %507 {offsets = [8, 0], sizes = [8, 32], strides = [1, 1]} : vector<64x32xf32> to vector<8x32xf32>
    %530 = arith.addf %529, %513 : vector<8x32xf32>
    %531 = math.tanh %530 : vector<8x32xf32>
    %532 = vector.broadcast %514 : vector<1x32xf32> to vector<8x32xf32>
    %533 = arith.mulf %531, %532 : vector<8x32xf32>
    %cst_175 = arith.constant dense<0.000000e+00> : vector<8xf32>
    %534 = vector.multi_reduction <add>, %533, %cst_175 [1] : vector<8x32xf32> to vector<8xf32>
    %535 = vector.shape_cast %534 : vector<8xf32> to vector<8x1xf32>
    %c1_i32 = arith.constant 1 : i32
    %536 = vector.broadcast %c1_i32 : i32 to vector<8x8xi32>
    %537 = arith.cmpi eq, %515, %536 : vector<8x8xi32>
    %538 = vector.shape_cast %535 : vector<8x1xf32> to vector<8x1xf32>
    %539 = vector.broadcast %538 : vector<8x1xf32> to vector<8x8xf32>
    %540 = arith.select %537, %539, %528 : vector<8x8xi1>, vector<8x8xf32>
    %541 = vector.extract_strided_slice %507 {offsets = [16, 0], sizes = [8, 32], strides = [1, 1]} : vector<64x32xf32> to vector<8x32xf32>
    %542 = arith.addf %541, %513 : vector<8x32xf32>
    %543 = math.tanh %542 : vector<8x32xf32>
    %544 = vector.broadcast %514 : vector<1x32xf32> to vector<8x32xf32>
    %545 = arith.mulf %543, %544 : vector<8x32xf32>
    %cst_176 = arith.constant dense<0.000000e+00> : vector<8xf32>
    %546 = vector.multi_reduction <add>, %545, %cst_176 [1] : vector<8x32xf32> to vector<8xf32>
    %547 = vector.shape_cast %546 : vector<8xf32> to vector<8x1xf32>
    %c2_i32 = arith.constant 2 : i32
    %548 = vector.broadcast %c2_i32 : i32 to vector<8x8xi32>
    %549 = arith.cmpi eq, %515, %548 : vector<8x8xi32>
    %550 = vector.shape_cast %547 : vector<8x1xf32> to vector<8x1xf32>
    %551 = vector.broadcast %550 : vector<8x1xf32> to vector<8x8xf32>
    %552 = arith.select %549, %551, %540 : vector<8x8xi1>, vector<8x8xf32>
    %553 = vector.extract_strided_slice %507 {offsets = [24, 0], sizes = [8, 32], strides = [1, 1]} : vector<64x32xf32> to vector<8x32xf32>
    %554 = arith.addf %553, %513 : vector<8x32xf32>
    %555 = math.tanh %554 : vector<8x32xf32>
    %556 = vector.broadcast %514 : vector<1x32xf32> to vector<8x32xf32>
    %557 = arith.mulf %555, %556 : vector<8x32xf32>
    %cst_177 = arith.constant dense<0.000000e+00> : vector<8xf32>
    %558 = vector.multi_reduction <add>, %557, %cst_177 [1] : vector<8x32xf32> to vector<8xf32>
    %559 = vector.shape_cast %558 : vector<8xf32> to vector<8x1xf32>
    %c3_i32 = arith.constant 3 : i32
    %560 = vector.broadcast %c3_i32 : i32 to vector<8x8xi32>
    %561 = arith.cmpi eq, %515, %560 : vector<8x8xi32>
    %562 = vector.shape_cast %559 : vector<8x1xf32> to vector<8x1xf32>
    %563 = vector.broadcast %562 : vector<8x1xf32> to vector<8x8xf32>
    %564 = arith.select %561, %563, %552 : vector<8x8xi1>, vector<8x8xf32>
    %565 = vector.extract_strided_slice %507 {offsets = [32, 0], sizes = [8, 32], strides = [1, 1]} : vector<64x32xf32> to vector<8x32xf32>
    %566 = arith.addf %565, %513 : vector<8x32xf32>
    %567 = math.tanh %566 : vector<8x32xf32>
    %568 = vector.broadcast %514 : vector<1x32xf32> to vector<8x32xf32>
    %569 = arith.mulf %567, %568 : vector<8x32xf32>
    %cst_178 = arith.constant dense<0.000000e+00> : vector<8xf32>
    %570 = vector.multi_reduction <add>, %569, %cst_178 [1] : vector<8x32xf32> to vector<8xf32>
    %571 = vector.shape_cast %570 : vector<8xf32> to vector<8x1xf32>
    %c4_i32 = arith.constant 4 : i32
    %572 = vector.broadcast %c4_i32 : i32 to vector<8x8xi32>
    %573 = arith.cmpi eq, %515, %572 : vector<8x8xi32>
    %574 = vector.shape_cast %571 : vector<8x1xf32> to vector<8x1xf32>
    %575 = vector.broadcast %574 : vector<8x1xf32> to vector<8x8xf32>
    %576 = arith.select %573, %575, %564 : vector<8x8xi1>, vector<8x8xf32>
    %577 = vector.extract_strided_slice %507 {offsets = [40, 0], sizes = [8, 32], strides = [1, 1]} : vector<64x32xf32> to vector<8x32xf32>
    %578 = arith.addf %577, %513 : vector<8x32xf32>
    %579 = math.tanh %578 : vector<8x32xf32>
    %580 = vector.broadcast %514 : vector<1x32xf32> to vector<8x32xf32>
    %581 = arith.mulf %579, %580 : vector<8x32xf32>
    %cst_179 = arith.constant dense<0.000000e+00> : vector<8xf32>
    %582 = vector.multi_reduction <add>, %581, %cst_179 [1] : vector<8x32xf32> to vector<8xf32>
    %583 = vector.shape_cast %582 : vector<8xf32> to vector<8x1xf32>
    %c5_i32 = arith.constant 5 : i32
    %584 = vector.broadcast %c5_i32 : i32 to vector<8x8xi32>
    %585 = arith.cmpi eq, %515, %584 : vector<8x8xi32>
    %586 = vector.shape_cast %583 : vector<8x1xf32> to vector<8x1xf32>
    %587 = vector.broadcast %586 : vector<8x1xf32> to vector<8x8xf32>
    %588 = arith.select %585, %587, %576 : vector<8x8xi1>, vector<8x8xf32>
    %589 = vector.extract_strided_slice %507 {offsets = [48, 0], sizes = [8, 32], strides = [1, 1]} : vector<64x32xf32> to vector<8x32xf32>
    %590 = arith.addf %589, %513 : vector<8x32xf32>
    %591 = math.tanh %590 : vector<8x32xf32>
    %592 = vector.broadcast %514 : vector<1x32xf32> to vector<8x32xf32>
    %593 = arith.mulf %591, %592 : vector<8x32xf32>
    %cst_180 = arith.constant dense<0.000000e+00> : vector<8xf32>
    %594 = vector.multi_reduction <add>, %593, %cst_180 [1] : vector<8x32xf32> to vector<8xf32>
    %595 = vector.shape_cast %594 : vector<8xf32> to vector<8x1xf32>
    %c6_i32 = arith.constant 6 : i32
    %596 = vector.broadcast %c6_i32 : i32 to vector<8x8xi32>
    %597 = arith.cmpi eq, %515, %596 : vector<8x8xi32>
    %598 = vector.shape_cast %595 : vector<8x1xf32> to vector<8x1xf32>
    %599 = vector.broadcast %598 : vector<8x1xf32> to vector<8x8xf32>
    %600 = arith.select %597, %599, %588 : vector<8x8xi1>, vector<8x8xf32>
    %601 = vector.extract_strided_slice %507 {offsets = [56, 0], sizes = [8, 32], strides = [1, 1]} : vector<64x32xf32> to vector<8x32xf32>
    %602 = arith.addf %601, %513 : vector<8x32xf32>
    %603 = math.tanh %602 : vector<8x32xf32>
    %604 = vector.broadcast %514 : vector<1x32xf32> to vector<8x32xf32>
    %605 = arith.mulf %603, %604 : vector<8x32xf32>
    %cst_181 = arith.constant dense<0.000000e+00> : vector<8xf32>
    %606 = vector.multi_reduction <add>, %605, %cst_181 [1] : vector<8x32xf32> to vector<8xf32>
    %607 = vector.shape_cast %606 : vector<8xf32> to vector<8x1xf32>
    %c7_i32 = arith.constant 7 : i32
    %608 = vector.broadcast %c7_i32 : i32 to vector<8x8xi32>
    %609 = arith.cmpi eq, %515, %608 : vector<8x8xi32>
    %610 = vector.shape_cast %607 : vector<8x1xf32> to vector<8x1xf32>
    %611 = vector.broadcast %610 : vector<8x1xf32> to vector<8x8xf32>
    %612 = arith.select %609, %611, %600 : vector<8x8xi1>, vector<8x8xf32>
    %c0_182 = arith.constant 0 : index
    %c0_183 = arith.constant 0 : index
    %613 = vector.load %arg11[%c0_182, %c0_183] : memref<8x8xf32, #tpu.memory_space<vmem>>, vector<8x8xf32>
    %614 = arith.addf %612, %613 : vector<8x8xf32>
    %cst_184 = arith.constant dense<0xFF800000> : vector<8xf32>
    %615 = vector.multi_reduction <maximumf>, %614, %cst_184 [1] : vector<8x8xf32> to vector<8xf32>
    %616 = vector.shape_cast %615 : vector<8xf32> to vector<8x1xf32>
    %617 = vector.broadcast %616 : vector<8x1xf32> to vector<8x8xf32>
    %618 = arith.subf %614, %617 : vector<8x8xf32>
    %619 = math.exp %618 : vector<8x8xf32>
    %cst_185 = arith.constant dense<0.000000e+00> : vector<8xf32>
    %620 = vector.multi_reduction <add>, %619, %cst_185 [1] : vector<8x8xf32> to vector<8xf32>
    %621 = vector.shape_cast %620 : vector<8xf32> to vector<8x1xf32>
    %622 = tpu.reciprocal %621 {approx = true} : vector<8x1xf32> -> vector<8x1xf32>
    %623 = vector.broadcast %622 : vector<8x1xf32> to vector<8x8xf32>
    %624 = arith.mulf %619, %623 : vector<8x8xf32>
    %cst_186 = arith.constant 0.000000e+00 : f32
    %625 = vector.broadcast %cst_186 : f32 to vector<8x32xf32>
    %626 = vector.extract_strided_slice %624 {offsets = [0, 0], sizes = [8, 1], strides = [1, 1]} : vector<8x8xf32> to vector<8x1xf32>
    %627 = vector.broadcast %626 : vector<8x1xf32> to vector<8x32xf32>
    %628 = arith.mulf %627, %293 : vector<8x32xf32>
    %629 = arith.addf %625, %628 : vector<8x32xf32>
    %630 = vector.extract_strided_slice %624 {offsets = [0, 1], sizes = [8, 1], strides = [1, 1]} : vector<8x8xf32> to vector<8x1xf32>
    %631 = vector.broadcast %630 : vector<8x1xf32> to vector<8x32xf32>
    %632 = arith.mulf %631, %323 : vector<8x32xf32>
    %633 = arith.addf %629, %632 : vector<8x32xf32>
    %634 = vector.extract_strided_slice %624 {offsets = [0, 2], sizes = [8, 1], strides = [1, 1]} : vector<8x8xf32> to vector<8x1xf32>
    %635 = vector.broadcast %634 : vector<8x1xf32> to vector<8x32xf32>
    %636 = arith.mulf %635, %353 : vector<8x32xf32>
    %637 = arith.addf %633, %636 : vector<8x32xf32>
    %638 = vector.extract_strided_slice %624 {offsets = [0, 3], sizes = [8, 1], strides = [1, 1]} : vector<8x8xf32> to vector<8x1xf32>
    %639 = vector.broadcast %638 : vector<8x1xf32> to vector<8x32xf32>
    %640 = arith.mulf %639, %383 : vector<8x32xf32>
    %641 = arith.addf %637, %640 : vector<8x32xf32>
    %642 = vector.extract_strided_slice %624 {offsets = [0, 4], sizes = [8, 1], strides = [1, 1]} : vector<8x8xf32> to vector<8x1xf32>
    %643 = vector.broadcast %642 : vector<8x1xf32> to vector<8x32xf32>
    %644 = arith.mulf %643, %413 : vector<8x32xf32>
    %645 = arith.addf %641, %644 : vector<8x32xf32>
    %646 = vector.extract_strided_slice %624 {offsets = [0, 5], sizes = [8, 1], strides = [1, 1]} : vector<8x8xf32> to vector<8x1xf32>
    %647 = vector.broadcast %646 : vector<8x1xf32> to vector<8x32xf32>
    %648 = arith.mulf %647, %443 : vector<8x32xf32>
    %649 = arith.addf %645, %648 : vector<8x32xf32>
    %650 = vector.extract_strided_slice %624 {offsets = [0, 6], sizes = [8, 1], strides = [1, 1]} : vector<8x8xf32> to vector<8x1xf32>
    %651 = vector.broadcast %650 : vector<8x1xf32> to vector<8x32xf32>
    %652 = arith.mulf %651, %473 : vector<8x32xf32>
    %653 = arith.addf %649, %652 : vector<8x32xf32>
    %654 = vector.extract_strided_slice %624 {offsets = [0, 7], sizes = [8, 1], strides = [1, 1]} : vector<8x8xf32> to vector<8x1xf32>
    %655 = vector.broadcast %654 : vector<8x1xf32> to vector<8x32xf32>
    %656 = arith.mulf %655, %503 : vector<8x32xf32>
    %657 = arith.addf %653, %656 : vector<8x32xf32>
    %658 = arith.truncf %657 : vector<8x32xf32> to vector<8x32xbf16>
    %c0_187 = arith.constant 0 : index
    %c0_188 = arith.constant 0 : index
    %659 = vector.load %arg9[%c0_187, %c0_188] : memref<32x5xbf16, #tpu.memory_space<vmem>>, vector<32x5xbf16>
    %cst_189 = arith.constant dense<0.000000e+00> : vector<8x5xf32>
    %660 = tpu.matmul %658, %659, %cst_189 {dimension_numbers = #tpu.dot_dimension_numbers<[1], [0], [0], [1], [0, 0, 1, 1], [], []>} : vector<8x32xbf16>, vector<32x5xbf16>, vector<8x5xf32> -> vector<8x5xf32>
    %c0_190 = arith.constant 0 : index
    %c0_191 = arith.constant 0 : index
    %661 = vector.load %arg10[%c0_190, %c0_191] : memref<1x5xf32, #tpu.memory_space<vmem>>, vector<1x5xf32>
    %662 = vector.broadcast %661 : vector<1x5xf32> to vector<8x5xf32>
    %663 = arith.addf %660, %662 : vector<8x5xf32>
    %c0_192 = arith.constant 0 : index
    %c0_193 = arith.constant 0 : index
    %664 = vector.load %arg12[%c0_192, %c0_193] : memref<8x5xf32, #tpu.memory_space<vmem>>, vector<8x5xf32>
    tpu.vector_store %arg12[%c0_192, %c0_193], %663 {strides = array<i32>} : memref<8x5xf32, #tpu.memory_space<vmem>>, vector<8x5xf32>,
    %c0_194 = arith.constant 0 : index
    %c0_195 = arith.constant 0 : index
    %665 = vector.load %arg13[%c0_194, %c0_195] : memref<8x8xf32, #tpu.memory_space<vmem>>, vector<8x8xf32>
    tpu.vector_store %arg13[%c0_194, %c0_195], %624 {strides = array<i32>} : memref<8x8xf32, #tpu.memory_space<vmem>>, vector<8x8xf32>,
    return
  }
  func.func @transform_0(%arg0: i32, %arg1: memref<64xi32, #tpu.memory_space<smem>>) -> (i32, i32, i32) {
    %c0_i32 = arith.constant 0 : i32
    %c0_i32_0 = arith.constant 0 : i32
    %c0_i32_1 = arith.constant 0 : i32
    %c0_i32_2 = arith.constant 0 : i32
    return %c0_i32, %c0_i32_0, %c0_i32_1 : i32, i32, i32
  }
  func.func @transform_1(%arg0: i32, %arg1: memref<64xi32, #tpu.memory_space<smem>>) -> (i32, i32) {
    %c0_i32 = arith.constant 0 : i32
    %c0_i32_0 = arith.constant 0 : i32
    %c0_i32_1 = arith.constant 0 : i32
    return %c0_i32, %c0_i32_0 : i32, i32
  }
  func.func @transform_2(%arg0: i32, %arg1: memref<64xi32, #tpu.memory_space<smem>>) -> (i32, i32) {
    %c0_i32 = arith.constant 0 : i32
    %c0_i32_0 = arith.constant 0 : i32
    %c0_i32_1 = arith.constant 0 : i32
    return %c0_i32, %c0_i32_0 : i32, i32
  }
  func.func @transform_3(%arg0: i32, %arg1: memref<64xi32, #tpu.memory_space<smem>>) -> (i32, i32) {
    %c0_i32 = arith.constant 0 : i32
    %c0_i32_0 = arith.constant 0 : i32
    %c0_i32_1 = arith.constant 0 : i32
    return %c0_i32, %c0_i32_0 : i32, i32
  }
  func.func @transform_4(%arg0: i32, %arg1: memref<64xi32, #tpu.memory_space<smem>>) -> (i32, i32) {
    %c0_i32 = arith.constant 0 : i32
    %c0_i32_0 = arith.constant 0 : i32
    %c0_i32_1 = arith.constant 0 : i32
    return %c0_i32, %c0_i32_0 : i32, i32
  }
  func.func @transform_5(%arg0: i32, %arg1: memref<64xi32, #tpu.memory_space<smem>>) -> (i32, i32) {
    %c0_i32 = arith.constant 0 : i32
    %c0_i32_0 = arith.constant 0 : i32
    %c0_i32_1 = arith.constant 0 : i32
    return %c0_i32, %c0_i32_0 : i32, i32
  }
  func.func @transform_6(%arg0: i32, %arg1: memref<64xi32, #tpu.memory_space<smem>>) -> (i32, i32) {
    %c0_i32 = arith.constant 0 : i32
    %c0_i32_0 = arith.constant 0 : i32
    %c0_i32_1 = arith.constant 0 : i32
    return %c0_i32, %c0_i32_0 : i32, i32
  }
  func.func @transform_7(%arg0: i32, %arg1: memref<64xi32, #tpu.memory_space<smem>>) -> (i32, i32) {
    %c0_i32 = arith.constant 0 : i32
    %c0_i32_0 = arith.constant 0 : i32
    %c0_i32_1 = arith.constant 0 : i32
    return %c0_i32, %c0_i32_0 : i32, i32
  }
  func.func @transform_8(%arg0: i32, %arg1: memref<64xi32, #tpu.memory_space<smem>>) -> (i32, i32) {
    %c0_i32 = arith.constant 0 : i32
    %c0_i32_0 = arith.constant 0 : i32
    %c0_i32_1 = arith.constant 0 : i32
    return %c0_i32, %c0_i32_0 : i32, i32
  }
  func.func @transform_9(%arg0: i32, %arg1: memref<64xi32, #tpu.memory_space<smem>>) -> (i32, i32) {
    %c0_i32 = arith.constant 0 : i32
    %c0_i32_0 = arith.constant 0 : i32
    %c0_i32_1 = arith.constant 0 : i32
    return %c0_i32, %c0_i32_0 : i32, i32
  }
  func.func @transform_10(%arg0: i32, %arg1: memref<64xi32, #tpu.memory_space<smem>>) -> (i32, i32) {
    %c0_i32 = arith.constant 0 : i32
    %c0_i32_0 = arith.constant 0 : i32
    %c0_i32_1 = arith.constant 0 : i32
    return %c0_i32, %c0_i32_0 : i32, i32
  }
  func.func @transform_11(%arg0: i32, %arg1: memref<64xi32, #tpu.memory_space<smem>>) -> (i32, i32) {
    %c0_i32 = arith.constant 0 : i32
    %c0_i32_0 = arith.constant 0 : i32
    %c0_i32_1 = arith.constant 0 : i32
    return %c0_i32, %c0_i32_0 : i32, i32
  }
}

</mosaic_0001>

<llo_original>
// kernel: rnn_model_forward.1
$region0: #{rnn_model_forward.1}
  #allocation0 [shape = 'u32[]', space=smem, size = 0x4, offset = 0x4, fixed_abs, tag = 'smem constant byte address 0x4 - core index']
  #allocation1 [shape = 'u32[72,128]{1,0:T(1,128)}', space=vmem, size = 0x9000, scoped, tag = 'internal scratch']
  #allocation2 [shape = 's32[1]{0}', space=sflag, size = 0x4, scoped, tag = 'scoped memory for rnn_model_forward.1']
  #allocation3 [shape = 'u8[512]{0}', space=smem, size = 0x200, scoped, tag = 'prefetched SMEM operand 0']
  %s0 = inlined_call_operand.vmem [shape: s32[64], index: 0, kind: input, shape index: {}]
  %s1 = inlined_call_operand.vmem [shape: f32[20,1,128], index: 1, kind: input, shape index: {}]
  %s2 = inlined_call_operand.vmem [shape: f32[1,128], index: 2, kind: input, shape index: {}]
  %s3 = inlined_call_operand.vmem [shape: bf16[32,128], index: 3, kind: input, shape index: {}]
  %s4 = inlined_call_operand.vmem [shape: bf16[32,32], index: 4, kind: input, shape index: {}]
  %s5 = inlined_call_operand.vmem [shape: bf16[32,32], index: 5, kind: input, shape index: {}]
  %s6 = inlined_call_operand.vmem [shape: f32[1,32], index: 6, kind: input, shape index: {}]
  %s7 = inlined_call_operand.vmem [shape: f32[1,32], index: 7, kind: input, shape index: {}]
  %s8 = inlined_call_operand.vmem [shape: bf16[32,5], index: 8, kind: input, shape index: {}]
  %s9 = inlined_call_operand.vmem [shape: f32[1,5], index: 9, kind: input, shape index: {}]
  %s10 = inlined_call_operand.vmem [shape: f32[8,8], index: 10, kind: input, shape index: {}]
  %s11 = inlined_call_operand.vmem [shape: f32[8,5], index: 11, kind: output, shape index: {0}]
  %s12 = inlined_call_operand.vmem [shape: f32[8,8], index: 12, kind: output, shape index: {1}]
  %13 = xla_tuple %s11, %s12
  %s14 = sld [smem:[#allocation0]]
  $region58: #{rnn_model_forward.1} parent=0
    _
  %s16 = ssub.s32 1, %s14
  %s17 = scalar_select 0, %s16, %s14
  %s19 = sshll.u32 %s0, 4
  %s20 = int_to_ptr.vmem [resolvable:$true] %s19
  %22 = dma.vmem_to_smem %s20, 16, [#allocation3], [#allocation2]
  %24 = dma.done [#allocation2], 16
  %25 = sfence
  // Predicated region
  $region2: #{rnn_model_forward.1} parent=0 // pred_check
    _
  $region3: #{rnn_model_forward.1} parent=0 // pred_check_branch
    %27 = sbr.rel (0) target = $region5
  $region4: #{rnn_model_forward.1} parent=0 // pred_region
    _
  $region5: #{rnn_model_forward.1} parent=0 // pred_fallthru
    _
  // Predicated region
  $region6: #{rnn_model_forward.1} parent=0 // pred_check
    _
  $region7: #{rnn_model_forward.1} parent=0 // pred_check_branch
    %29 = sbr.rel (0) target = $region9
  $region8: #{rnn_model_forward.1} parent=0 // pred_region
    _
  $region9: #{rnn_model_forward.1} parent=0 // pred_fallthru
    _
  // Predicated region
  $region10: #{rnn_model_forward.1} parent=0 // pred_check
    _
  $region11: #{rnn_model_forward.1} parent=0 // pred_check_branch
    %31 = sbr.rel (0) target = $region13
  $region12: #{rnn_model_forward.1} parent=0 // pred_region
    _
  $region13: #{rnn_model_forward.1} parent=0 // pred_fallthru
    _
  // Predicated region
  $region14: #{rnn_model_forward.1} parent=0 // pred_check
    _
  $region15: #{rnn_model_forward.1} parent=0 // pred_check_branch
    %33 = sbr.rel (0) target = $region17
  $region16: #{rnn_model_forward.1} parent=0 // pred_region
    _
  $region17: #{rnn_model_forward.1} parent=0 // pred_fallthru
    _
  // Predicated region
  $region18: #{rnn_model_forward.1} parent=0 // pred_check
    _
  $region19: #{rnn_model_forward.1} parent=0 // pred_check_branch
    %35 = sbr.rel (0) target = $region21
  $region20: #{rnn_model_forward.1} parent=0 // pred_region
    _
  $region21: #{rnn_model_forward.1} parent=0 // pred_fallthru
    _
  // Predicated region
  $region22: #{rnn_model_forward.1} parent=0 // pred_check
    _
  $region23: #{rnn_model_forward.1} parent=0 // pred_check_branch
    %37 = sbr.rel (0) target = $region25
  $region24: #{rnn_model_forward.1} parent=0 // pred_region
    _
  $region25: #{rnn_model_forward.1} parent=0 // pred_fallthru
    _
  // Predicated region
  $region26: #{rnn_model_forward.1} parent=0 // pred_check
    _
  $region27: #{rnn_model_forward.1} parent=0 // pred_check_branch
    %39 = sbr.rel (0) target = $region29
  $region28: #{rnn_model_forward.1} parent=0 // pred_region
    _
  $region29: #{rnn_model_forward.1} parent=0 // pred_fallthru
    _
  // Predicated region
  $region30: #{rnn_model_forward.1} parent=0 // pred_check
    _
  $region31: #{rnn_model_forward.1} parent=0 // pred_check_branch
    %41 = sbr.rel (0) target = $region33
  $region32: #{rnn_model_forward.1} parent=0 // pred_region
    _
  $region33: #{rnn_model_forward.1} parent=0 // pred_fallthru
    _
  // Predicated region
  $region34: #{rnn_model_forward.1} parent=0 // pred_check
    _
  $region35: #{rnn_model_forward.1} parent=0 // pred_check_branch
    %43 = sbr.rel (0) target = $region37
  $region36: #{rnn_model_forward.1} parent=0 // pred_region
    _
  $region37: #{rnn_model_forward.1} parent=0 // pred_fallthru
    _
  // Predicated region
  $region38: #{rnn_model_forward.1} parent=0 // pred_check
    _
  $region39: #{rnn_model_forward.1} parent=0 // pred_check_branch
    %45 = sbr.rel (0) target = $region41
  $region40: #{rnn_model_forward.1} parent=0 // pred_region
    _
  $region41: #{rnn_model_forward.1} parent=0 // pred_fallthru
    _
  %s47 = sld [smem:[#allocation3]]
  %s48 = scalar_lea.vmem %s1, %s47
  %v49 = vld [vmem:[%s48] sm:$0x1]
  %s50 = sld [smem:[#allocation3 + $0x1]]
  %s51 = scalar_lea.vmem %s1, %s50
  %v52 = vld [vmem:[%s51] sm:$0x1]
  %s53 = sld [smem:[#allocation3 + $0x2]]
  %s54 = scalar_lea.vmem %s1, %s53
  %v55 = vld [vmem:[%s54] sm:$0x1]
  %s56 = sld [smem:[#allocation3 + $0x3]]
  %s57 = scalar_lea.vmem %s1, %s56
  %v58 = vld [vmem:[%s57] sm:$0x1]
  %s59 = sld [smem:[#allocation3 + $0x4]]
  %s60 = scalar_lea.vmem %s1, %s59
  %v61 = vld [vmem:[%s60] sm:$0x1]
  %s62 = sld [smem:[#allocation3 + $0x5]]
  %s63 = scalar_lea.vmem %s1, %s62
  %v64 = vld [vmem:[%s63] sm:$0x1]
  %s65 = sld [smem:[#allocation3 + $0x6]]
  %s66 = scalar_lea.vmem %s1, %s65
  %v67 = vld [vmem:[%s66] sm:$0x1]
  %s68 = sld [smem:[#allocation3 + $0x7]]
  %s69 = scalar_lea.vmem %s1, %s68
  %v70 = vld [vmem:[%s69] sm:$0x1]
  %v72 = vperm.slane %v52, 0
  %v75 = vperm.slane %v55, 0
  %v78 = vperm.slane %v58, 0
  %v81 = vperm.slane %v61, 0
  %v84 = vperm.slane %v64, 0
  %v87 = vperm.slane %v67, 0
  %v90 = vperm.slane %v70, 0
  %vm92 = vcmask 1040384
  %v93 = vsel %vm92, %v49, %v72
  %vm94 = vcmask 1041408
  %v95 = vsel %vm94, %v93, %v75
  %vm96 = vcmask 1042432
  %v97 = vsel %vm96, %v95, %v78
  %vm98 = vcmask 1043456
  %v99 = vsel %vm98, %v97, %v81
  %vm100 = vcmask 1044480
  %v101 = vsel %vm100, %v99, %v84
  %vm102 = vcmask 1045504
  %v103 = vsel %vm102, %v101, %v87
  %vm104 = vcmask 1046528
  %v105 = vsel %vm104, %v103, %v90
  %s106 = sld [smem:[#allocation3 + $0x8]]
  %s107 = scalar_lea.vmem %s1, %s106
  %v108 = vld [vmem:[%s107] sm:$0x1]
  %s109 = sld [smem:[#allocation3 + $0x9]]
  %s110 = scalar_lea.vmem %s1, %s109
  %v111 = vld [vmem:[%s110] sm:$0x1]
  %s112 = sld [smem:[#allocation3 + $0xa]]
  %s113 = scalar_lea.vmem %s1, %s112
  %v114 = vld [vmem:[%s113] sm:$0x1]
  %s115 = sld [smem:[#allocation3 + $0xb]]
  %s116 = scalar_lea.vmem %s1, %s115
  %v117 = vld [vmem:[%s116] sm:$0x1]
  %s118 = sld [smem:[#allocation3 + $0xc]]
  %s119 = scalar_lea.vmem %s1, %s118
  %v120 = vld [vmem:[%s119] sm:$0x1]
  %s121 = sld [smem:[#allocation3 + $0xd]]
  %s122 = scalar_lea.vmem %s1, %s121
  %v123 = vld [vmem:[%s122] sm:$0x1]
  %s124 = sld [smem:[#allocation3 + $0xe]]
  %s125 = scalar_lea.vmem %s1, %s124
  %v126 = vld [vmem:[%s125] sm:$0x1]
  %s127 = sld [smem:[#allocation3 + $0xf]]
  %s128 = scalar_lea.vmem %s1, %s127
  %v129 = vld [vmem:[%s128] sm:$0x1]
  %v131 = vperm.slane %v111, 0
  %v134 = vperm.slane %v114, 0
  %v137 = vperm.slane %v117, 0
  %v140 = vperm.slane %v120, 0
  %v143 = vperm.slane %v123, 0
  %v146 = vperm.slane %v126, 0
  %v149 = vperm.slane %v129, 0
  %v151 = vsel %vm92, %v108, %v131
  %v152 = vsel %vm94, %v151, %v134
  %v153 = vsel %vm96, %v152, %v137
  %v154 = vsel %vm98, %v153, %v140
  %v155 = vsel %vm100, %v154, %v143
  %v156 = vsel %vm102, %v155, %v146
  %v157 = vsel %vm104, %v156, %v149
  %s158 = sld [smem:[#allocation3 + $0x10]]
  %s159 = scalar_lea.vmem %s1, %s158
  %v160 = vld [vmem:[%s159] sm:$0x1]
  %s161 = sld [smem:[#allocation3 + $0x11]]
  %s162 = scalar_lea.vmem %s1, %s161
  %v163 = vld [vmem:[%s162] sm:$0x1]
  %s164 = sld [smem:[#allocation3 + $0x12]]
  %s165 = scalar_lea.vmem %s1, %s164
  %v166 = vld [vmem:[%s165] sm:$0x1]
  %s167 = sld [smem:[#allocation3 + $0x13]]
  %s168 = scalar_lea.vmem %s1, %s167
  %v169 = vld [vmem:[%s168] sm:$0x1]
  %s170 = sld [smem:[#allocation3 + $0x14]]
  %s171 = scalar_lea.vmem %s1, %s170
  %v172 = vld [vmem:[%s171] sm:$0x1]
  %s173 = sld [smem:[#allocation3 + $0x15]]
  %s174 = scalar_lea.vmem %s1, %s173
  %v175 = vld [vmem:[%s174] sm:$0x1]
  %s176 = sld [smem:[#allocation3 + $0x16]]
  %s177 = scalar_lea.vmem %s1, %s176
  %v178 = vld [vmem:[%s177] sm:$0x1]
  %s179 = sld [smem:[#allocation3 + $0x17]]
  %s180 = scalar_lea.vmem %s1, %s179
  %v181 = vld [vmem:[%s180] sm:$0x1]
  %v183 = vperm.slane %v163, 0
  %v186 = vperm.slane %v166, 0
  %v189 = vperm.slane %v169, 0
  %v192 = vperm.slane %v172, 0
  %v195 = vperm.slane %v175, 0
  %v198 = vperm.slane %v178, 0
  %v201 = vperm.slane %v181, 0
  %v203 = vsel %vm92, %v160, %v183
  %v204 = vsel %vm94, %v203, %v186
  %v205 = vsel %vm96, %v204, %v189
  %v206 = vsel %vm98, %v205, %v192
  %v207 = vsel %vm100, %v206, %v195
  %v208 = vsel %vm102, %v207, %v198
  %v209 = vsel %vm104, %v208, %v201
  %s210 = sld [smem:[#allocation3 + $0x18]]
  %s211 = scalar_lea.vmem %s1, %s210
  %v212 = vld [vmem:[%s211] sm:$0x1]
  %s213 = sld [smem:[#allocation3 + $0x19]]
  %s214 = scalar_lea.vmem %s1, %s213
  %v215 = vld [vmem:[%s214] sm:$0x1]
  %s216 = sld [smem:[#allocation3 + $0x1a]]
  %s217 = scalar_lea.vmem %s1, %s216
  %v218 = vld [vmem:[%s217] sm:$0x1]
  %s219 = sld [smem:[#allocation3 + $0x1b]]
  %s220 = scalar_lea.vmem %s1, %s219
  %v221 = vld [vmem:[%s220] sm:$0x1]
  %s222 = sld [smem:[#allocation3 + $0x1c]]
  %s223 = scalar_lea.vmem %s1, %s222
  %v224 = vld [vmem:[%s223] sm:$0x1]
  %s225 = sld [smem:[#allocation3 + $0x1d]]
  %s226 = scalar_lea.vmem %s1, %s225
  %v227 = vld [vmem:[%s226] sm:$0x1]
  %s228 = sld [smem:[#allocation3 + $0x1e]]
  %s229 = scalar_lea.vmem %s1, %s228
  %v230 = vld [vmem:[%s229] sm:$0x1]
  %s231 = sld [smem:[#allocation3 + $0x1f]]
  %s232 = scalar_lea.vmem %s1, %s231
  %v233 = vld [vmem:[%s232] sm:$0x1]
  %v235 = vperm.slane %v215, 0
  %v238 = vperm.slane %v218, 0
  %v241 = vperm.slane %v221, 0
  %v244 = vperm.slane %v224, 0
  %v247 = vperm.slane %v227, 0
  %v250 = vperm.slane %v230, 0
  %v253 = vperm.slane %v233, 0
  %v255 = vsel %vm92, %v212, %v235
  %v256 = vsel %vm94, %v255, %v238
  %v257 = vsel %vm96, %v256, %v241
  %v258 = vsel %vm98, %v257, %v244
  %v259 = vsel %vm100, %v258, %v247
  %v260 = vsel %vm102, %v259, %v250
  %v261 = vsel %vm104, %v260, %v253
  %s262 = sld [smem:[#allocation3 + $0x20]]
  %s263 = scalar_lea.vmem %s1, %s262
  %v264 = vld [vmem:[%s263] sm:$0x1]
  %s265 = sld [smem:[#allocation3 + $0x21]]
  %s266 = scalar_lea.vmem %s1, %s265
  %v267 = vld [vmem:[%s266] sm:$0x1]
  %s268 = sld [smem:[#allocation3 + $0x22]]
  %s269 = scalar_lea.vmem %s1, %s268
  %v270 = vld [vmem:[%s269] sm:$0x1]
  %s271 = sld [smem:[#allocation3 + $0x23]]
  %s272 = scalar_lea.vmem %s1, %s271
  %v273 = vld [vmem:[%s272] sm:$0x1]
  %s274 = sld [smem:[#allocation3 + $0x24]]
  %s275 = scalar_lea.vmem %s1, %s274
  %v276 = vld [vmem:[%s275] sm:$0x1]
  %s277 = sld [smem:[#allocation3 + $0x25]]
  %s278 = scalar_lea.vmem %s1, %s277
  %v279 = vld [vmem:[%s278] sm:$0x1]
  %s280 = sld [smem:[#allocation3 + $0x26]]
  %s281 = scalar_lea.vmem %s1, %s280
  %v282 = vld [vmem:[%s281] sm:$0x1]
  %s283 = sld [smem:[#allocation3 + $0x27]]
  %s284 = scalar_lea.vmem %s1, %s283
  %v285 = vld [vmem:[%s284] sm:$0x1]
  %v287 = vperm.slane %v267, 0
  %v290 = vperm.slane %v270, 0
  %v293 = vperm.slane %v273, 0
  %v296 = vperm.slane %v276, 0
  %v299 = vperm.slane %v279, 0
  %v302 = vperm.slane %v282, 0
  %v305 = vperm.slane %v285, 0
  %v307 = vsel %vm92, %v264, %v287
  %v308 = vsel %vm94, %v307, %v290
  %v309 = vsel %vm96, %v308, %v293
  %v310 = vsel %vm98, %v309, %v296
  %v311 = vsel %vm100, %v310, %v299
  %v312 = vsel %vm102, %v311, %v302
  %v313 = vsel %vm104, %v312, %v305
  %s314 = sld [smem:[#allocation3 + $0x28]]
  %s315 = scalar_lea.vmem %s1, %s314
  %v316 = vld [vmem:[%s315] sm:$0x1]
  %s317 = sld [smem:[#allocation3 + $0x29]]
  %s318 = scalar_lea.vmem %s1, %s317
  %v319 = vld [vmem:[%s318] sm:$0x1]
  %s320 = sld [smem:[#allocation3 + $0x2a]]
  %s321 = scalar_lea.vmem %s1, %s320
  %v322 = vld [vmem:[%s321] sm:$0x1]
  %s323 = sld [smem:[#allocation3 + $0x2b]]
  %s324 = scalar_lea.vmem %s1, %s323
  %v325 = vld [vmem:[%s324] sm:$0x1]
  %s326 = sld [smem:[#allocation3 + $0x2c]]
  %s327 = scalar_lea.vmem %s1, %s326
  %v328 = vld [vmem:[%s327] sm:$0x1]
  %s329 = sld [smem:[#allocation3 + $0x2d]]
  %s330 = scalar_lea.vmem %s1, %s329
  %v331 = vld [vmem:[%s330] sm:$0x1]
  %s332 = sld [smem:[#allocation3 + $0x2e]]
  %s333 = scalar_lea.vmem %s1, %s332
  %v334 = vld [vmem:[%s333] sm:$0x1]
  %s335 = sld [smem:[#allocation3 + $0x2f]]
  %s336 = scalar_lea.vmem %s1, %s335
  %v337 = vld [vmem:[%s336] sm:$0x1]
  %v339 = vperm.slane %v319, 0
  %v342 = vperm.slane %v322, 0
  %v345 = vperm.slane %v325, 0
  %v348 = vperm.slane %v328, 0
  %v351 = vperm.slane %v331, 0
  %v354 = vperm.slane %v334, 0
  %v357 = vperm.slane %v337, 0
  %v359 = vsel %vm92, %v316, %v339
  %v360 = vsel %vm94, %v359, %v342
  %v361 = vsel %vm96, %v360, %v345
  %v362 = vsel %vm98, %v361, %v348
  %v363 = vsel %vm100, %v362, %v351
  %v364 = vsel %vm102, %v363, %v354
  %v365 = vsel %vm104, %v364, %v357
  %s366 = sld [smem:[#allocation3 + $0x30]]
  %s367 = scalar_lea.vmem %s1, %s366
  %v368 = vld [vmem:[%s367] sm:$0x1]
  %s369 = sld [smem:[#allocation3 + $0x31]]
  %s370 = scalar_lea.vmem %s1, %s369
  %v371 = vld [vmem:[%s370] sm:$0x1]
  %s372 = sld [smem:[#allocation3 + $0x32]]
  %s373 = scalar_lea.vmem %s1, %s372
  %v374 = vld [vmem:[%s373] sm:$0x1]
  %s375 = sld [smem:[#allocation3 + $0x33]]
  %s376 = scalar_lea.vmem %s1, %s375
  %v377 = vld [vmem:[%s376] sm:$0x1]
  %s378 = sld [smem:[#allocation3 + $0x34]]
  %s379 = scalar_lea.vmem %s1, %s378
  %v380 = vld [vmem:[%s379] sm:$0x1]
  %s381 = sld [smem:[#allocation3 + $0x35]]
  %s382 = scalar_lea.vmem %s1, %s381
  %v383 = vld [vmem:[%s382] sm:$0x1]
  %s384 = sld [smem:[#allocation3 + $0x36]]
  %s385 = scalar_lea.vmem %s1, %s384
  %v386 = vld [vmem:[%s385] sm:$0x1]
  %s387 = sld [smem:[#allocation3 + $0x37]]
  %s388 = scalar_lea.vmem %s1, %s387
  %v389 = vld [vmem:[%s388] sm:$0x1]
  %v391 = vperm.slane %v371, 0
  %v394 = vperm.slane %v374, 0
  %v397 = vperm.slane %v377, 0
  %v400 = vperm.slane %v380, 0
  %v403 = vperm.slane %v383, 0
  %v406 = vperm.slane %v386, 0
  %v409 = vperm.slane %v389, 0
  %v411 = vsel %vm92, %v368, %v391
  %v412 = vsel %vm94, %v411, %v394
  %v413 = vsel %vm96, %v412, %v397
  %v414 = vsel %vm98, %v413, %v400
  %v415 = vsel %vm100, %v414, %v403
  %v416 = vsel %vm102, %v415, %v406
  %v417 = vsel %vm104, %v416, %v409
  %s418 = sld [smem:[#allocation3 + $0x38]]
  %s419 = scalar_lea.vmem %s1, %s418
  %v420 = vld [vmem:[%s419] sm:$0x1]
  %s421 = sld [smem:[#allocation3 + $0x39]]
  %s422 = scalar_lea.vmem %s1, %s421
  %v423 = vld [vmem:[%s422] sm:$0x1]
  %s424 = sld [smem:[#allocation3 + $0x3a]]
  %s425 = scalar_lea.vmem %s1, %s424
  %v426 = vld [vmem:[%s425] sm:$0x1]
  %s427 = sld [smem:[#allocation3 + $0x3b]]
  %s428 = scalar_lea.vmem %s1, %s427
  %v429 = vld [vmem:[%s428] sm:$0x1]
  %s430 = sld [smem:[#allocation3 + $0x3c]]
  %s431 = scalar_lea.vmem %s1, %s430
  %v432 = vld [vmem:[%s431] sm:$0x1]
  %s433 = sld [smem:[#allocation3 + $0x3d]]
  %s434 = scalar_lea.vmem %s1, %s433
  %v435 = vld [vmem:[%s434] sm:$0x1]
  %s436 = sld [smem:[#allocation3 + $0x3e]]
  %s437 = scalar_lea.vmem %s1, %s436
  %v438 = vld [vmem:[%s437] sm:$0x1]
  %s439 = sld [smem:[#allocation3 + $0x3f]]
  %s440 = scalar_lea.vmem %s1, %s439
  %v441 = vld [vmem:[%s440] sm:$0x1]
  %v443 = vperm.slane %v423, 0
  %v446 = vperm.slane %v426, 0
  %v449 = vperm.slane %v429, 0
  %v452 = vperm.slane %v432, 0
  %v455 = vperm.slane %v435, 0
  %v458 = vperm.slane %v438, 0
  %v461 = vperm.slane %v441, 0
  %v463 = vsel %vm92, %v420, %v443
  %v464 = vsel %vm94, %v463, %v446
  %v465 = vsel %vm96, %v464, %v449
  %v466 = vsel %vm98, %v465, %v452
  %v467 = vsel %vm100, %v466, %v455
  %v468 = vsel %vm102, %v467, %v458
  %v469 = vsel %vm104, %v468, %v461
  %v470 = vld [vmem:[%s3] sm:$0xf]
  %v471 = vld [vmem:[%s3 + $0x4] sm:$0xf]
  %v472 = vld [vmem:[%s3 + $0x8] sm:$0xf]
  %v473 = vld [vmem:[%s3 + $0xc] sm:$0xf]
  %v474 = vld [vmem:[%s2] sm:$0x1]
  %v476 = vperm.slane %v474, 0
  %v478 = vadd.f32 %v105, %v476
  %v479 = vxor.u32 %v478, 2147483648
  %v480 = vmul.f32 %v479, 1.442695
  %v481 = vpow.pop %v480
  %v482 = vadd.f32 %v481, 1.0
  %v483 = vrcp.pop %v482
  %v484 = vmul.f32 %v482, %v483
  %v485 = vsub.f32 1.0, %v484
  %v486 = vmul.f32 %v483, %v485
  %v487 = vadd.f32 %v483, %v486
  %vm488 = vweird.f32 %v482
  %vm489 = vweird.f32 %v483
  %vm490 = vmor %vm488, %vm489
  %v491 = vsel %vm490, %v483, %v487
  %v492 = vand.u32 2147483647, %v482
  %vm493 = vcmp.eq.f32.partialorder %v492, 8.507059e+37
  %v494 = vand.u32 %v482, 2147483648
  %v495 = vor.u32 1.1754944e-38, %v494
  %v496 = vsel %vm493, %v495, %v491
  %v497 = vmul.f32 1.0, %v496
  %v498 = vtanh.pop %v478
  %v499 = vmul.f32 %v497, 0.0
  %501 = vrot.lane.b32.xlu0 %v498, 64
  %v502 = vpop.permute.xlu0 %501
  %v504 = vmul.f32 %v497, %v502
  %506 = vrot.lane.b32.xlu0 %v504, 32
  %v507 = vpop.permute.xlu0 %506
  %v509 = vadd.f32 %v499, %v507
  %v510 = vtanh.pop %v509
  %512 = vrot.lane.b32.xlu0 %v510, 64
  %v513 = vpop.permute.xlu0 %512
  %v515 = vmul.f32 %v497, %v513
  %v516 = vpack.c.bf16 %v515, %v515
  %v517 = vadd.f32 %v157, %v476
  %519 = vrot.lane.b32.xlu0 %v516, 32
  %v520 = vpop.permute.xlu0 %519
  %v525 = vunpack.c.l.b16 %v470
  %v526 = vunpack.c.l.b16 %v471
  %v527 = vunpack.c.l.b16 %v472
  %v528 = vunpack.c.l.b16 %v473
  %v529 = vpack.c.b16 %v526, %v525
  %v530 = vpack.c.b16 %v528, %v527
  %vm533 = vcmask 261120
  %v535 = vsel %vm533, %v520, 0
  %537 = vmatpush.bf16.msra.mxu0 0
  %538 = vmatpush.bf16.msra.mxu0 0
  %539 = vmatpush.bf16.msra.mxu0 0
  %540 = vmatpush.bf16.msra.mxu0 0
  %541 = vmatpush.bf16.msra.mxu0 0
  %542 = vmatpush.bf16.msra.mxu0 0
  %543 = vmatpush.bf16.msra.mxu0 %v530
  %544 = vmatpush.bf16.msra.mxu0 %v529
  %545 = vmatmul.bf16.gmra.mxu0 %v535
  %v546 = vpop.f32.mrf.mxu0
  %v547 = vadd.f32 0.0, %v546
  %v548 = vpop.f32.mrf.mxu0
  %549 = vdwg.mxu0
  %v550 = vadd.f32 %v517, %v547
  %v551 = vxor.u32 %v550, 2147483648
  %v552 = vmul.f32 %v551, 1.442695
  %v553 = vpow.pop %v552
  %v554 = vadd.f32 %v553, 1.0
  %v555 = vrcp.pop %v554
  %v556 = vmul.f32 %v554, %v555
  %v557 = vsub.f32 1.0, %v556
  %v558 = vmul.f32 %v555, %v557
  %v559 = vadd.f32 %v555, %v558
  %vm560 = vweird.f32 %v554
  %vm561 = vweird.f32 %v555
  %vm562 = vmor %vm560, %vm561
  %v563 = vsel %vm562, %v555, %v559
  %v564 = vand.u32 2147483647, %v554
  %vm565 = vcmp.eq.f32.partialorder %v564, 8.507059e+37
  %v566 = vand.u32 %v554, 2147483648
  %v567 = vor.u32 1.1754944e-38, %v566
  %v568 = vsel %vm565, %v567, %v563
  %v569 = vmul.f32 1.0, %v568
  %v570 = vtanh.pop %v550
  %v571 = vmul.f32 %v569, %v509
  %573 = vrot.lane.b32.xlu0 %v570, 64
  %v574 = vpop.permute.xlu0 %573
  %v576 = vmul.f32 %v569, %v574
  %578 = vrot.lane.b32.xlu0 %v576, 32
  %v579 = vpop.permute.xlu0 %578
  %v581 = vadd.f32 %v571, %v579
  %v582 = vtanh.pop %v581
  %584 = vrot.lane.b32.xlu0 %v582, 64
  %v585 = vpop.permute.xlu0 %584
  %v587 = vmul.f32 %v569, %v585
  %v588 = vpack.c.bf16 %v587, %v587
  %v589 = vadd.f32 %v209, %v476
  %591 = vrot.lane.b32.xlu0 %v588, 32
  %v592 = vpop.permute.xlu0 %591
  %v594 = vsel %vm533, %v592, 0
  %596 = vmatpush.bf16.msra.mxu0 0
  %597 = vmatpush.bf16.msra.mxu0 0
  %598 = vmatpush.bf16.msra.mxu0 0
  %599 = vmatpush.bf16.msra.mxu0 0
  %600 = vmatpush.bf16.msra.mxu0 0
  %601 = vmatpush.bf16.msra.mxu0 0
  %602 = vmatpush.bf16.msra.mxu0 %v530
  %603 = vmatpush.bf16.msra.mxu0 %v529
  %604 = vmatmul.bf16.gmra.mxu0 %v594
  %v605 = vpop.f32.mrf.mxu0
  %v606 = vadd.f32 0.0, %v605
  %v607 = vpop.f32.mrf.mxu0
  %608 = vdwg.mxu0
  %v609 = vadd.f32 %v589, %v606
  %v610 = vxor.u32 %v609, 2147483648
  %v611 = vmul.f32 %v610, 1.442695
  %v612 = vpow.pop %v611
  %v613 = vadd.f32 %v612, 1.0
  %v614 = vrcp.pop %v613
  %v615 = vmul.f32 %v613, %v614
  %v616 = vsub.f32 1.0, %v615
  %v617 = vmul.f32 %v614, %v616
  %v618 = vadd.f32 %v614, %v617
  %vm619 = vweird.f32 %v613
  %vm620 = vweird.f32 %v614
  %vm621 = vmor %vm619, %vm620
  %v622 = vsel %vm621, %v614, %v618
  %v623 = vand.u32 2147483647, %v613
  %vm624 = vcmp.eq.f32.partialorder %v623, 8.507059e+37
  %v625 = vand.u32 %v613, 2147483648
  %v626 = vor.u32 1.1754944e-38, %v625
  %v627 = vsel %vm624, %v626, %v622
  %v628 = vmul.f32 1.0, %v627
  %v629 = vtanh.pop %v609
  %v630 = vmul.f32 %v628, %v581
  %632 = vrot.lane.b32.xlu0 %v629, 64
  %v633 = vpop.permute.xlu0 %632
  %v635 = vmul.f32 %v628, %v633
  %637 = vrot.lane.b32.xlu0 %v635, 32
  %v638 = vpop.permute.xlu0 %637
  %v640 = vadd.f32 %v630, %v638
  %v641 = vtanh.pop %v640
  %643 = vrot.lane.b32.xlu0 %v641, 64
  %v644 = vpop.permute.xlu0 %643
  %v646 = vmul.f32 %v628, %v644
  %v647 = vpack.c.bf16 %v646, %v646
  %v648 = vadd.f32 %v261, %v476
  %650 = vrot.lane.b32.xlu0 %v647, 32
  %v651 = vpop.permute.xlu0 %650
  %v653 = vsel %vm533, %v651, 0
  %655 = vmatpush.bf16.msra.mxu0 0
  %656 = vmatpush.bf16.msra.mxu0 0
  %657 = vmatpush.bf16.msra.mxu0 0
  %658 = vmatpush.bf16.msra.mxu0 0
  %659 = vmatpush.bf16.msra.mxu0 0
  %660 = vmatpush.bf16.msra.mxu0 0
  %661 = vmatpush.bf16.msra.mxu0 %v530
  %662 = vmatpush.bf16.msra.mxu0 %v529
  %663 = vmatmul.bf16.gmra.mxu0 %v653
  %v664 = vpop.f32.mrf.mxu0
  %v665 = vadd.f32 0.0, %v664
  %v666 = vpop.f32.mrf.mxu0
  %667 = vdwg.mxu0
  %v668 = vadd.f32 %v648, %v665
  %v669 = vxor.u32 %v668, 2147483648
  %v670 = vmul.f32 %v669, 1.442695
  %v671 = vpow.pop %v670
  %v672 = vadd.f32 %v671, 1.0
  %v673 = vrcp.pop %v672
  %v674 = vmul.f32 %v672, %v673
  %v675 = vsub.f32 1.0, %v674
  %v676 = vmul.f32 %v673, %v675
  %v677 = vadd.f32 %v673, %v676
  %vm678 = vweird.f32 %v672
  %vm679 = vweird.f32 %v673
  %vm680 = vmor %vm678, %vm679
  %v681 = vsel %vm680, %v673, %v677
  %v682 = vand.u32 2147483647, %v672
  %vm683 = vcmp.eq.f32.partialorder %v682, 8.507059e+37
  %v684 = vand.u32 %v672, 2147483648
  %v685 = vor.u32 1.1754944e-38, %v684
  %v686 = vsel %vm683, %v685, %v681
  %v687 = vmul.f32 1.0, %v686
  %v688 = vtanh.pop %v668
  %v689 = vmul.f32 %v687, %v640
  %691 = vrot.lane.b32.xlu0 %v688, 64
  %v692 = vpop.permute.xlu0 %691
  %v694 = vmul.f32 %v687, %v692
  %696 = vrot.lane.b32.xlu0 %v694, 32
  %v697 = vpop.permute.xlu0 %696
  %v699 = vadd.f32 %v689, %v697
  %v700 = vtanh.pop %v699
  %702 = vrot.lane.b32.xlu0 %v700, 64
  %v703 = vpop.permute.xlu0 %702
  %v705 = vmul.f32 %v687, %v703
  %v706 = vpack.c.bf16 %v705, %v705
  %v707 = vadd.f32 %v313, %v476
  %709 = vrot.lane.b32.xlu0 %v706, 32
  %v710 = vpop.permute.xlu0 %709
  %v712 = vsel %vm533, %v710, 0
  %714 = vmatpush.bf16.msra.mxu0 0
  %715 = vmatpush.bf16.msra.mxu0 0
  %716 = vmatpush.bf16.msra.mxu0 0
  %717 = vmatpush.bf16.msra.mxu0 0
  %718 = vmatpush.bf16.msra.mxu0 0
  %719 = vmatpush.bf16.msra.mxu0 0
  %720 = vmatpush.bf16.msra.mxu0 %v530
  %721 = vmatpush.bf16.msra.mxu0 %v529
  %722 = vmatmul.bf16.gmra.mxu0 %v712
  %v723 = vpop.f32.mrf.mxu0
  %v724 = vadd.f32 0.0, %v723
  %v725 = vpop.f32.mrf.mxu0
  %726 = vdwg.mxu0
  %v727 = vadd.f32 %v707, %v724
  %v728 = vxor.u32 %v727, 2147483648
  %v729 = vmul.f32 %v728, 1.442695
  %v730 = vpow.pop %v729
  %v731 = vadd.f32 %v730, 1.0
  %v732 = vrcp.pop %v731
  %v733 = vmul.f32 %v731, %v732
  %v734 = vsub.f32 1.0, %v733
  %v735 = vmul.f32 %v732, %v734
  %v736 = vadd.f32 %v732, %v735
  %vm737 = vweird.f32 %v731
  %vm738 = vweird.f32 %v732
  %vm739 = vmor %vm737, %vm738
  %v740 = vsel %vm739, %v732, %v736
  %v741 = vand.u32 2147483647, %v731
  %vm742 = vcmp.eq.f32.partialorder %v741, 8.507059e+37
  %v743 = vand.u32 %v731, 2147483648
  %v744 = vor.u32 1.1754944e-38, %v743
  %v745 = vsel %vm742, %v744, %v740
  %v746 = vmul.f32 1.0, %v745
  %v747 = vtanh.pop %v727
  %v748 = vmul.f32 %v746, %v699
  %750 = vrot.lane.b32.xlu0 %v747, 64
  %v751 = vpop.permute.xlu0 %750
  %v753 = vmul.f32 %v746, %v751
  %755 = vrot.lane.b32.xlu0 %v753, 32
  %v756 = vpop.permute.xlu0 %755
  %v758 = vadd.f32 %v748, %v756
  %v759 = vtanh.pop %v758
  %761 = vrot.lane.b32.xlu0 %v759, 64
  %v762 = vpop.permute.xlu0 %761
  %v764 = vmul.f32 %v746, %v762
  %v765 = vpack.c.bf16 %v764, %v764
  %v766 = vadd.f32 %v365, %v476
  %768 = vrot.lane.b32.xlu0 %v765, 32
  %v769 = vpop.permute.xlu0 %768
  %v771 = vsel %vm533, %v769, 0
  %773 = vmatpush.bf16.msra.mxu0 0
  %774 = vmatpush.bf16.msra.mxu0 0
  %775 = vmatpush.bf16.msra.mxu0 0
  %776 = vmatpush.bf16.msra.mxu0 0
  %777 = vmatpush.bf16.msra.mxu0 0
  %778 = vmatpush.bf16.msra.mxu0 0
  %779 = vmatpush.bf16.msra.mxu0 %v530
  %780 = vmatpush.bf16.msra.mxu0 %v529
  %781 = vmatmul.bf16.gmra.mxu0 %v771
  %v782 = vpop.f32.mrf.mxu0
  %v783 = vadd.f32 0.0, %v782
  %v784 = vpop.f32.mrf.mxu0
  %785 = vdwg.mxu0
  %v786 = vadd.f32 %v766, %v783
  %v787 = vxor.u32 %v786, 2147483648
  %v788 = vmul.f32 %v787, 1.442695
  %v789 = vpow.pop %v788
  %v790 = vadd.f32 %v789, 1.0
  %v791 = vrcp.pop %v790
  %v792 = vmul.f32 %v790, %v791
  %v793 = vsub.f32 1.0, %v792
  %v794 = vmul.f32 %v791, %v793
  %v795 = vadd.f32 %v791, %v794
  %vm796 = vweird.f32 %v790
  %vm797 = vweird.f32 %v791
  %vm798 = vmor %vm796, %vm797
  %v799 = vsel %vm798, %v791, %v795
  %v800 = vand.u32 2147483647, %v790
  %vm801 = vcmp.eq.f32.partialorder %v800, 8.507059e+37
  %v802 = vand.u32 %v790, 2147483648
  %v803 = vor.u32 1.1754944e-38, %v802
  %v804 = vsel %vm801, %v803, %v799
  %v805 = vmul.f32 1.0, %v804
  %v806 = vtanh.pop %v786
  %v807 = vmul.f32 %v805, %v758
  %809 = vrot.lane.b32.xlu0 %v806, 64
  %v810 = vpop.permute.xlu0 %809
  %v812 = vmul.f32 %v805, %v810
  %814 = vrot.lane.b32.xlu0 %v812, 32
  %v815 = vpop.permute.xlu0 %814
  %v817 = vadd.f32 %v807, %v815
  %v818 = vtanh.pop %v817
  %820 = vrot.lane.b32.xlu0 %v818, 64
  %v821 = vpop.permute.xlu0 %820
  %v823 = vmul.f32 %v805, %v821
  %v824 = vpack.c.bf16 %v823, %v823
  %v825 = vadd.f32 %v417, %v476
  %827 = vrot.lane.b32.xlu0 %v824, 32
  %v828 = vpop.permute.xlu0 %827
  %v830 = vsel %vm533, %v828, 0
  %832 = vmatpush.bf16.msra.mxu0 0
  %833 = vmatpush.bf16.msra.mxu0 0
  %834 = vmatpush.bf16.msra.mxu0 0
  %835 = vmatpush.bf16.msra.mxu0 0
  %836 = vmatpush.bf16.msra.mxu0 0
  %837 = vmatpush.bf16.msra.mxu0 0
  %838 = vmatpush.bf16.msra.mxu0 %v530
  %839 = vmatpush.bf16.msra.mxu0 %v529
  %840 = vmatmul.bf16.gmra.mxu0 %v830
  %v841 = vpop.f32.mrf.mxu0
  %v842 = vadd.f32 0.0, %v841
  %v843 = vpop.f32.mrf.mxu0
  %844 = vdwg.mxu0
  %v845 = vadd.f32 %v825, %v842
  %v846 = vxor.u32 %v845, 2147483648
  %v847 = vmul.f32 %v846, 1.442695
  %v848 = vpow.pop %v847
  %v849 = vadd.f32 %v848, 1.0
  %v850 = vrcp.pop %v849
  %v851 = vmul.f32 %v849, %v850
  %v852 = vsub.f32 1.0, %v851
  %v853 = vmul.f32 %v850, %v852
  %v854 = vadd.f32 %v850, %v853
  %vm855 = vweird.f32 %v849
  %vm856 = vweird.f32 %v850
  %vm857 = vmor %vm855, %vm856
  %v858 = vsel %vm857, %v850, %v854
  %v859 = vand.u32 2147483647, %v849
  %vm860 = vcmp.eq.f32.partialorder %v859, 8.507059e+37
  %v861 = vand.u32 %v849, 2147483648
  %v862 = vor.u32 1.1754944e-38, %v861
  %v863 = vsel %vm860, %v862, %v858
  %v864 = vmul.f32 1.0, %v863
  %v865 = vtanh.pop %v845
  %v866 = vmul.f32 %v864, %v817
  %868 = vrot.lane.b32.xlu0 %v865, 64
  %v869 = vpop.permute.xlu0 %868
  %v871 = vmul.f32 %v864, %v869
  %873 = vrot.lane.b32.xlu0 %v871, 32
  %v874 = vpop.permute.xlu0 %873
  %v876 = vadd.f32 %v866, %v874
  %v877 = vtanh.pop %v876
  %879 = vrot.lane.b32.xlu0 %v877, 64
  %v880 = vpop.permute.xlu0 %879
  %v882 = vmul.f32 %v864, %v880
  %v883 = vpack.c.bf16 %v882, %v882
  %v884 = vadd.f32 %v469, %v476
  %886 = vrot.lane.b32.xlu0 %v883, 32
  %v887 = vpop.permute.xlu0 %886
  %v889 = vsel %vm533, %v887, 0
  %891 = vmatpush.bf16.msra.mxu0 0
  %892 = vmatpush.bf16.msra.mxu0 0
  %893 = vmatpush.bf16.msra.mxu0 0
  %894 = vmatpush.bf16.msra.mxu0 0
  %895 = vmatpush.bf16.msra.mxu0 0
  %896 = vmatpush.bf16.msra.mxu0 0
  %897 = vmatpush.bf16.msra.mxu0 %v530
  %898 = vmatpush.bf16.msra.mxu0 %v529
  %899 = vmatmul.bf16.gmra.mxu0 %v889
  %v900 = vpop.f32.mrf.mxu0
  %v901 = vadd.f32 0.0, %v900
  %v902 = vpop.f32.mrf.mxu0
  %903 = vdwg.mxu0
  %v904 = vadd.f32 %v884, %v901
  %v905 = vxor.u32 %v904, 2147483648
  %v906 = vmul.f32 %v905, 1.442695
  %v907 = vpow.pop %v906
  %v908 = vadd.f32 %v907, 1.0
  %v909 = vrcp.pop %v908
  %v910 = vmul.f32 %v908, %v909
  %v911 = vsub.f32 1.0, %v910
  %v912 = vmul.f32 %v909, %v911
  %v913 = vadd.f32 %v909, %v912
  %vm914 = vweird.f32 %v908
  %vm915 = vweird.f32 %v909
  %vm916 = vmor %vm914, %vm915
  %v917 = vsel %vm916, %v909, %v913
  %v918 = vand.u32 2147483647, %v908
  %vm919 = vcmp.eq.f32.partialorder %v918, 8.507059e+37
  %v920 = vand.u32 %v908, 2147483648
  %v921 = vor.u32 1.1754944e-38, %v920
  %v922 = vsel %vm919, %v921, %v917
  %v923 = vmul.f32 1.0, %v922
  %v924 = vtanh.pop %v904
  %v925 = vmul.f32 %v923, %v876
  %927 = vrot.lane.b32.xlu0 %v924, 64
  %v928 = vpop.permute.xlu0 %927
  %v930 = vmul.f32 %v923, %v928
  %932 = vrot.lane.b32.xlu0 %v930, 32
  %v933 = vpop.permute.xlu0 %932
  %v935 = vadd.f32 %v925, %v933
  %v936 = vtanh.pop %v935
  %938 = vrot.lane.b32.xlu0 %v936, 64
  %v939 = vpop.permute.xlu0 %938
  %v941 = vmul.f32 %v923, %v939
  %v942 = vpack.c.bf16 %v587, %v515
  %v943 = vpack.c.bf16 %v705, %v646
  %v944 = vpack.c.bf16 %v823, %v764
  %v945 = vpack.c.bf16 %v941, %v882
  %v946 = vld [vmem:[%s4] sm:$0xf]
  %v947 = vld [vmem:[%s4 + $0x4] sm:$0xf]
  %v948 = vld [vmem:[%s4 + $0x8] sm:$0xf]
  %v949 = vld [vmem:[%s4 + $0xc] sm:$0xf]
  %954 = vrot.lane.b32.xlu0 %v942, 32
  %v955 = vpop.permute.xlu0 %954
  %956 = vrot.lane.b32.xlu0 %v943, 32
  %v957 = vpop.permute.xlu0 %956
  %958 = vrot.lane.b32.xlu0 %v944, 32
  %v959 = vpop.permute.xlu0 %958
  %960 = vrot.lane.b32.xlu0 %v945, 32
  %v961 = vpop.permute.xlu0 %960
  %v966 = vunpack.c.l.b16 %v946
  %v967 = vunpack.c.l.b16 %v947
  %v968 = vunpack.c.l.b16 %v948
  %v969 = vunpack.c.l.b16 %v949
  %v970 = vpack.c.b16 %v967, %v966
  %v971 = vpack.c.b16 %v969, %v968
  %v975 = vsel %vm533, %v955, 0
  %v978 = vsel %vm533, %v957, 0
  %v981 = vsel %vm533, %v959, 0
  %v984 = vsel %vm533, %v961, 0
  %986 = vmatpush.bf16.msra.mxu0 0
  %987 = vmatpush.bf16.msra.mxu0 0
  %988 = vmatpush.bf16.msra.mxu0 0
  %989 = vmatpush.bf16.msra.mxu0 0
  %990 = vmatpush.bf16.msra.mxu0 0
  %991 = vmatpush.bf16.msra.mxu0 0
  %992 = vmatpush.bf16.msra.mxu0 %v971
  %993 = vmatpush.bf16.msra.mxu0 %v970
  %994 = vmatmul.bf16.gmra.mxu0 %v975
  %v995 = vpop.f32.mrf.mxu0
  %v996 = vadd.f32 0.0, %v995
  %v997 = vpop.f32.mrf.mxu0
  %v998 = vadd.f32 0.0, %v997
  %999 = vmatmul.bf16.gmra.mxu0 %v978
  %v1000 = vpop.f32.mrf.mxu0
  %v1001 = vadd.f32 0.0, %v1000
  %v1002 = vpop.f32.mrf.mxu0
  %v1003 = vadd.f32 0.0, %v1002
  %1004 = vmatmul.bf16.gmra.mxu0 %v981
  %v1005 = vpop.f32.mrf.mxu0
  %v1006 = vadd.f32 0.0, %v1005
  %v1007 = vpop.f32.mrf.mxu0
  %v1008 = vadd.f32 0.0, %v1007
  %1009 = vmatmul.bf16.gmra.mxu0 %v984
  %v1010 = vpop.f32.mrf.mxu0
  %v1011 = vadd.f32 0.0, %v1010
  %v1012 = vpop.f32.mrf.mxu0
  %v1013 = vadd.f32 0.0, %v1012
  %1014 = vdwg.mxu0
  %v1015 = vpack.c.bf16 %v935, %v935
  %v1016 = vld [vmem:[%s5] sm:$0xf]
  %v1017 = vld [vmem:[%s5 + $0x4] sm:$0xf]
  %v1018 = vld [vmem:[%s5 + $0x8] sm:$0xf]
  %v1019 = vld [vmem:[%s5 + $0xc] sm:$0xf]
  %v1020 = vld [vmem:[%s6] sm:$0x1]
  %v1022 = vperm.slane %v1020, 0
  %1025 = vrot.lane.b32.xlu0 %v1015, 96
  %v1026 = vpop.permute.xlu0 %1025
  %v1031 = vunpack.c.l.b16 %v1016
  %v1032 = vunpack.c.l.b16 %v1017
  %v1033 = vunpack.c.l.b16 %v1018
  %v1034 = vunpack.c.l.b16 %v1019
  %v1035 = vpack.c.b16 %v1032, %v1031
  %v1036 = vpack.c.b16 %v1034, %v1033
  %v1040 = vsel %vm533, %v1026, 0
  %1042 = vmatpush.bf16.msra.mxu0 0
  %1043 = vmatpush.bf16.msra.mxu0 0
  %1044 = vmatpush.bf16.msra.mxu0 0
  %1045 = vmatpush.bf16.msra.mxu0 0
  %1046 = vmatpush.bf16.msra.mxu0 0
  %1047 = vmatpush.bf16.msra.mxu0 0
  %1048 = vmatpush.bf16.msra.mxu0 %v1036
  %1049 = vmatpush.bf16.msra.mxu0 %v1035
  %1050 = vmatmul.bf16.gmra.mxu0 %v1040
  %v1051 = vpop.f32.mrf.mxu0
  %v1052 = vadd.f32 %v1022, %v1051
  %v1053 = vpop.f32.mrf.mxu0
  %1054 = vdwg.mxu0
  %v1055 = vld [vmem:[%s7] sm:$0x1]
  %v1056 = vlaneseq
  %v1057 = vand.u32 %v1056, 127
  %v1058 = vadd.f32 %v996, %v1052
  %v1059 = vtanh.pop %v1058
  %v1061 = vperm.slane %v1055, 0
  %v1063 = vmul.f32 %v1059, %v1061
  %v1064 = vsel %vm533, %v1063, 0.0
  %1065 = vadd.xlane.f32.xlu0 %v1064
  %v1066 = vpop.xlane.xlu0 %1065
  %vm1067 = vcmp.eq.s32.totalorder %v1057, 0
  %v1068 = vsel %vm1067, %v1066, 0.0
  %v1069 = vadd.f32 %v998, %v1052
  %v1070 = vtanh.pop %v1069
  %v1071 = vmul.f32 %v1070, %v1061
  %v1072 = vsel %vm533, %v1071, 0.0
  %1073 = vadd.xlane.f32.xlu0 %v1072
  %v1074 = vpop.xlane.xlu0 %1073
  %vm1075 = vcmp.eq.s32.totalorder %v1057, 1
  %v1076 = vsel %vm1075, %v1074, %v1068
  %v1077 = vadd.f32 %v1001, %v1052
  %v1078 = vtanh.pop %v1077
  %v1079 = vmul.f32 %v1078, %v1061
  %v1080 = vsel %vm533, %v1079, 0.0
  %1081 = vadd.xlane.f32.xlu0 %v1080
  %v1082 = vpop.xlane.xlu0 %1081
  %vm1083 = vcmp.eq.s32.totalorder %v1057, 2
  %v1084 = vsel %vm1083, %v1082, %v1076
  %v1085 = vadd.f32 %v1003, %v1052
  %v1086 = vtanh.pop %v1085
  %v1087 = vmul.f32 %v1086, %v1061
  %v1088 = vsel %vm533, %v1087, 0.0
  %1089 = vadd.xlane.f32.xlu0 %v1088
  %v1090 = vpop.xlane.xlu0 %1089
  %vm1091 = vcmp.eq.s32.totalorder %v1057, 3
  %v1092 = vsel %vm1091, %v1090, %v1084
  %v1093 = vadd.f32 %v1006, %v1052
  %v1094 = vtanh.pop %v1093
  %v1095 = vmul.f32 %v1094, %v1061
  %v1096 = vsel %vm533, %v1095, 0.0
  %1097 = vadd.xlane.f32.xlu0 %v1096
  %v1098 = vpop.xlane.xlu0 %1097
  %vm1099 = vcmp.eq.s32.totalorder %v1057, 4
  %v1100 = vsel %vm1099, %v1098, %v1092
  %v1101 = vadd.f32 %v1008, %v1052
  %v1102 = vtanh.pop %v1101
  %v1103 = vmul.f32 %v1102, %v1061
  %v1104 = vsel %vm533, %v1103, 0.0
  %1105 = vadd.xlane.f32.xlu0 %v1104
  %v1106 = vpop.xlane.xlu0 %1105
  %vm1107 = vcmp.eq.s32.totalorder %v1057, 5
  %v1108 = vsel %vm1107, %v1106, %v1100
  %v1109 = vadd.f32 %v1011, %v1052
  %v1110 = vtanh.pop %v1109
  %v1111 = vmul.f32 %v1110, %v1061
  %v1112 = vsel %vm533, %v1111, 0.0
  %1113 = vadd.xlane.f32.xlu0 %v1112
  %v1114 = vpop.xlane.xlu0 %1113
  %vm1115 = vcmp.eq.s32.totalorder %v1057, 6
  %v1116 = vsel %vm1115, %v1114, %v1108
  %v1117 = vadd.f32 %v1013, %v1052
  %v1118 = vtanh.pop %v1117
  %v1119 = vmul.f32 %v1118, %v1061
  %v1120 = vsel %vm533, %v1119, 0.0
  %1121 = vadd.xlane.f32.xlu0 %v1120
  %v1122 = vpop.xlane.xlu0 %1121
  %vm1123 = vcmp.eq.s32.totalorder %v1057, 7
  %v1124 = vsel %vm1123, %v1122, %v1116
  %v1125 = vld [vmem:[%s10] sm:$0xff]
  %v1126 = vadd.f32 %v1124, %v1125
  %vm1127 = vcmask 64512
  %v1128 = vsel %vm1127, %v1126, -inf
  %1129 = vmax.xlane.f32.xlu0 %v1128
  %v1130 = vpop.xlane.xlu0 %1129
  %v1131 = vsub.f32 %v1126, %v1130
  %v1132 = vmul.f32 %v1131, 1.442695
  %v1133 = vpow.pop %v1132
  %v1134 = vsel %vm1127, %v1133, 0.0
  %1135 = vadd.xlane.f32.xlu0 %v1134
  %v1136 = vpop.xlane.xlu0 %1135
  %v1137 = vrcp.pop %v1136
  %v1138 = vmul.f32 %v1133, %v1137
  %1140 = vset.pattern.permute.xlu0 0
  %1141 = vperm.xlu0 %1140, %v1138
  %v1142 = vpop.permute.xlu0 %1141
  %v1144 = vmul.f32 %v1142, %v515
  %v1145 = vadd.f32 %v1144, 0.0
  %1146 = vset.pattern.permute.xlu0 1
  %1147 = vperm.xlu0 %1146, %v1138
  %v1148 = vpop.permute.xlu0 %1147
  %v1150 = vmul.f32 %v1148, %v587
  %v1151 = vadd.f32 %v1145, %v1150
  %1152 = vset.pattern.permute.xlu0 2
  %1153 = vperm.xlu0 %1152, %v1138
  %v1154 = vpop.permute.xlu0 %1153
  %v1156 = vmul.f32 %v1154, %v646
  %v1157 = vadd.f32 %v1151, %v1156
  %1158 = vset.pattern.permute.xlu0 3
  %1159 = vperm.xlu0 %1158, %v1138
  %v1160 = vpop.permute.xlu0 %1159
  %v1162 = vmul.f32 %v1160, %v705
  %v1163 = vadd.f32 %v1157, %v1162
  %1164 = vset.pattern.permute.xlu0 4
  %1165 = vperm.xlu0 %1164, %v1138
  %v1166 = vpop.permute.xlu0 %1165
  %v1168 = vmul.f32 %v1166, %v764
  %v1169 = vadd.f32 %v1163, %v1168
  %1170 = vset.pattern.permute.xlu0 5
  %1171 = vperm.xlu0 %1170, %v1138
  %v1172 = vpop.permute.xlu0 %1171
  %v1174 = vmul.f32 %v1172, %v823
  %v1175 = vadd.f32 %v1169, %v1174
  %1176 = vset.pattern.permute.xlu0 6
  %1177 = vperm.xlu0 %1176, %v1138
  %v1178 = vpop.permute.xlu0 %1177
  %v1180 = vmul.f32 %v1178, %v882
  %v1181 = vadd.f32 %v1175, %v1180
  %1182 = vset.pattern.permute.xlu0 7
  %1183 = vperm.xlu0 %1182, %v1138
  %v1184 = vpop.permute.xlu0 %1183
  %v1186 = vmul.f32 %v1184, %v941
  %v1187 = vadd.f32 %v1181, %v1186
  %v1188 = vpack.c.bf16 %v1187, %v1187
  %v1189 = vld [vmem:[%s8] sm:$0xf]
  %v1190 = vld [vmem:[%s8 + $0x4] sm:$0xf]
  %v1191 = vld [vmem:[%s8 + $0x8] sm:$0xf]
  %v1192 = vld [vmem:[%s8 + $0xc] sm:$0xf]
  %v1193 = vld [vmem:[%s9] sm:$0x1]
  %v1195 = vperm.slane %v1193, 0
  %1198 = vrot.lane.b32.xlu0 %v1188, 32
  %v1199 = vpop.permute.xlu0 %1198
  %v1204 = vunpack.c.l.b16 %v1189
  %v1205 = vunpack.c.l.b16 %v1190
  %v1206 = vunpack.c.l.b16 %v1191
  %v1207 = vunpack.c.l.b16 %v1192
  %v1208 = vpack.c.b16 %v1205, %v1204
  %v1209 = vpack.c.b16 %v1207, %v1206
  %v1213 = vsel %vm533, %v1199, 0
  %1215 = vmatpush.bf16.msra.mxu0 0
  %1216 = vmatpush.bf16.msra.mxu0 0
  %1217 = vmatpush.bf16.msra.mxu0 0
  %1218 = vmatpush.bf16.msra.mxu0 0
  %1219 = vmatpush.bf16.msra.mxu0 0
  %1220 = vmatpush.bf16.msra.mxu0 0
  %1221 = vmatpush.bf16.msra.mxu0 %v1209
  %1222 = vmatpush.bf16.msra.mxu0 %v1208
  %1223 = vmatmul.bf16.gmra.mxu0 %v1213
  %v1224 = vpop.f32.mrf.mxu0
  %v1225 = vadd.f32 %v1195, %v1224
  %v1226 = vpop.f32.mrf.mxu0
  %1227 = vdwg.mxu0
  %vm1228 = vcmask 39936
  %1229 = vst.msk [vmem:[%s11] sm:$0xff] %vm1228, %v1225
  %1230 = vst.msk [vmem:[%s12] sm:$0xff] %vm1127, %v1138
  // Predicated region
  $region42: #{rnn_model_forward.1} parent=0 // pred_check
    _
  $region43: #{rnn_model_forward.1} parent=0 // pred_check_branch
    %1232 = sbr.rel (0) target = $region45
  $region44: #{rnn_model_forward.1} parent=0 // pred_region
    _
  $region45: #{rnn_model_forward.1} parent=0 // pred_fallthru
    _
  // Predicated region
  $region46: #{rnn_model_forward.1} parent=0 // pred_check
    _
  $region47: #{rnn_model_forward.1} parent=0 // pred_check_branch
    %1234 = sbr.rel (0) target = $region49
  $region48: #{rnn_model_forward.1} parent=0 // pred_region
    _
  $region49: #{rnn_model_forward.1} parent=0 // pred_fallthru
    _
  // Predicated region
  $region50: #{rnn_model_forward.1} parent=0 // pred_check
    _
  $region51: #{rnn_model_forward.1} parent=0 // pred_check_branch
    %1236 = sbr.rel (0) target = $region53
  $region52: #{rnn_model_forward.1} parent=0 // pred_region
    _
  $region53: #{rnn_model_forward.1} parent=0 // pred_fallthru
    _
  // Predicated region
  $region54: #{rnn_model_forward.1} parent=0 // pred_check
    _
  $region55: #{rnn_model_forward.1} parent=0 // pred_check_branch
    %1238 = sbr.rel (0) target = $region57
  $region56: #{rnn_model_forward.1} parent=0 // pred_region
    _
  $region57: #{rnn_model_forward.1} parent=0 // pred_fallthru
    _

</llo_original>
